<compile_context>
chip_gen: v6e
topology: v6e:2x2x1
jax: 0.10.0
libtpu: 0.0.40
codegen_flags: <defaults>
</compile_context>

<pallas_src>
import numpy as np
import jax
import jax.numpy as jnp
from jax import lax
from jax.experimental import pallas as pl
from jax.experimental.pallas import tpu as pltpu

LANES = 128
SUBLANES = 8


def _round_up(x, m):
    return (x + m - 1) // m * m


# ---------------------------------------------------------------------------
# Hardware-derived knobs
# ---------------------------------------------------------------------------
def _vmem_capacity_bytes():
    try:
        return int(pltpu.get_tpu_info().vmem_capacity_bytes)
    except Exception:
        pass
    try:
        kind = jax.devices()[0].device_kind.lower()
        return 64 * 1024 * 1024 if "v7" in kind else 128 * 1024 * 1024
    except Exception:
        return 64 * 1024 * 1024          # conservative fallback


def _depthwise_dtype():
    # bf16 VALU exists on v6e/v7x; keep the 3x3 taps in f32 on v5e and older.
    try:
        kind = jax.devices()[0].device_kind.lower()
        if "v6" in kind or "v7" in kind:
            return jnp.bfloat16
    except Exception:
        pass
    return jnp.float32


# ---------------------------------------------------------------------------
# Row-tile picker (budget derived from VMEM capacity; non-divisor Ho allowed)
# ---------------------------------------------------------------------------
def _pick_tile_rows(Ho, *, cols_in, cols_out, Cin_p, Hd_p, Oup_p, stride,
                    max_rows, budget_bytes, dw_bytes):
    best = 1
    for cand in range(1, min(Ho, max_rows) + 1):
        if stride == 1:
            rows_cols = (cand + 2) * cols_in
        else:
            rows_cols = 4 * (cand + 1) * cols_in
        est = (2 * rows_cols * Cin_p * 2                      # bf16 input, 2 slots
               + rows_cols * Hd_p * 4                         # f32 expand output
               + rows_cols * Hd_p * dw_bytes                  # h in depthwise dtype
               + 3 * cand * cols_out * Hd_p * dw_bytes        # shifted tap slices
               + cand * cols_out * Hd_p * 4                   # f32 accumulator
               + 2 * cand * cols_out * Oup_p * 4              # f32 output, 2 bufs
               + 2 * rows_cols * 4)                           # mask, 2 bufs
        if est <= budget_bytes:
            best = cand
    return best


# ---------------------------------------------------------------------------
# Kernel
# ---------------------------------------------------------------------------
def _make_kernel(*, stride, has_expand, use_res, THo, R, C, Wo_p,
                 Cin_p, Hd_p, Oup_p, dw_dtype):
    """One (image, row-tile) grid step.
    R = input rows per tile (per parity plane for stride 2), C = input cols."""

    def kernel(*refs):
        if has_expand:
            (x_hbm, m_ref, w1_ref, b1_ref, wd_ref, b2_ref, w3_ref, b3_ref,
             o_ref, buf, sem) = refs
        else:
            x_hbm, wd_ref, b2_ref, w3_ref, b3_ref, o_ref, buf, sem = refs

        n = pl.program_id(0)
        t = pl.program_id(1)
        T = pl.num_programs(1)
        slot = t % 2

        def copy_for(tt, sl):
            if stride == 1:
                src = x_hbm.at[n, pl.ds(tt * THo, R)]
            else:
                src = x_hbm.at[n, :, pl.ds(tt * THo, R)]
            return pltpu.make_async_copy(src, buf.at[sl], sem.at[sl])

        # Manual double-buffered input DMA: overlapping halo windows can't be
        # expressed as plain Blocked BlockSpecs.  The row-tile axis is marked
        # "arbitrary", so t runs sequentially per image and the prefetch issued
        # at step t for step t+1 is always waited at step t+1 on the same core.
        @pl.when(t == 0)
        def _():
            copy_for(t, slot).start()

        copy_for(t, slot).wait()

        @pl.when(t + 1 < T)
        def _():
            copy_for(t + 1, 1 - slot).start()

        xt = buf[slot]        # stride1: (R,C,Cin_p) bf16; stride2: (4,R,C,Cin_p)

        # ---- 1x1 expand (bf16 MXU) + bias + ReLU6, then re-zero conv padding ----
        if has_expand:
            if stride == 1:
                rows, sp = R * C, (R, C)
            else:
                rows, sp = 4 * R * C, (4, R, C)
            x2 = xt.reshape(rows, Cin_p)
            h2 = jnp.dot(x2, w1_ref[...], preferred_element_type=jnp.float32)
            h2 = jnp.clip(h2 + b1_ref[...], 0.0, 6.0)
            # multiply by the precomputed 0/1 padding mask (bias+ReLU6 made the
            # conv-padding positions non-zero); cheaper than iota+compare+select.
            h = h2.reshape(sp + (Hd_p,)) * m_ref[0]
            h = h.astype(dw_dtype)
        else:
            h = xt.astype(dw_dtype)        # conv padding is already physically zero

        wd = wd_ref[...]                   # (9, Hd_p), BN scale folded, dw dtype
        b2 = b2_ref[...]                   # (1, Hd_p) f32

        # ---- 3x3 depthwise: contiguous value slices, hoisted column shifts ----
        shifted = {}
        acc = None
        if stride == 1:
            for kx in range(3):
                shifted[kx] = h[:, kx:kx + Wo_p, :]          # 3 shifts, not 9
                hk = shifted[kx]
                for ky in range(3):
                    tap = hk[ky:ky + THo]                    # row offset is free
                    contrib = tap * wd[3 * ky + kx:3 * ky + kx + 1, :]
                    acc = (contrib + b2) if acc is None else acc + contrib
        else:
            for ky in range(3):
                for kx in range(3):
                    plane = 2 * (ky % 2) + (kx % 2)
                    cs = kx // 2
                    key = (plane, cs)
                    if key not in shifted:
                        shifted[key] = h[plane, :, cs:cs + Wo_p, :]
                    tap = shifted[key][ky // 2:ky // 2 + THo]
                    contrib = tap * wd[3 * ky + kx:3 * ky + kx + 1, :]
                    acc = (contrib + b2) if acc is None else acc + contrib

        d = jnp.clip(acc, 0.0, 6.0)

        # ---- 1x1 project (bf16 MXU) + bias (no activation) ----
        d2 = d.reshape(THo * Wo_p, Hd_p).astype(jnp.bfloat16)
        y2 = jnp.dot(d2, w3_ref[...], preferred_element_type=jnp.float32)
        y2 = y2 + b3_ref[...]
        y = y2.reshape(THo, Wo_p, Oup_p)

        # residual (stride == 1 and inp == oup only)
        if use_res:
            y = y + xt[1:1 + THo, 1:1 + Wo_p, :].astype(jnp.float32)

        o_ref[0] = y.astype(o_ref.dtype)

    return kernel


# ---------------------------------------------------------------------------
# Wrapper
# ---------------------------------------------------------------------------
def inverted_residual_pallas(x_nhwc, params, hidden, *, stride, expand_ratio, oup,
                             max_out_rows=None):
    """Eval-mode InvertedResidual. x_nhwc: (N, H, W, Cin) f32 -> (N, Ho, Wo, oup) f32."""
    N, H, W, Cin = x_nhwc.shape
    has_expand = expand_ratio != 1
    use_res = (stride == 1) and (Cin == oup)
    Ho = (H + 2 - 3) // stride + 1
    Wo = (W + 2 - 3) // stride + 1

    Cin_p = _round_up(Cin, LANES)
    Hd_p = _round_up(hidden, LANES)
    Oup_p = _round_up(oup, LANES)
    Wo_p = _round_up(Wo, SUBLANES)

    dw_dtype = _depthwise_dtype()
    dw_bytes = np.dtype(dw_dtype).itemsize

    vmem_cap = _vmem_capacity_bytes()
    vmem_limit = min(int(vmem_cap * 0.6), 100 * 1024 * 1024)
    tile_budget = int(vmem_limit * 0.55)

    if stride == 1:
        cols_in = _round_up(Wo_p + 2, 16)        # padded input cols (bf16 packing)
    else:
        cols_in = _round_up(Wo_p + 1, 16)        # cols per parity plane

    max_rows = Ho if max_out_rows is None else max_out_rows
    THo = _pick_tile_rows(Ho, cols_in=cols_in, cols_out=Wo_p, Cin_p=Cin_p,
                          Hd_p=Hd_p, Oup_p=Oup_p, stride=stride,
                          max_rows=max_rows, budget_bytes=tile_budget,
                          dw_bytes=dw_bytes)
    T = (Ho + THo - 1) // THo                    # non-divisor Ho: pad output rows up
    Ho_pad = T * THo

    # ---- fold BN scales into the conv weights; pad channels to lane multiples ----
    def pad2(a, r, c):
        a = jnp.asarray(a, jnp.float32)
        return jnp.pad(a, ((0, r - a.shape[0]), (0, c - a.shape[1])))

    if has_expand:
        w1 = pad2(params["w1"] * params["s1"], Cin_p, Hd_p).astype(jnp.bfloat16)
        b1 = pad2(params["b1"], 1, Hd_p)
    wd = pad2(params["wd"] * params["s2"], 9, Hd_p).astype(dw_dtype)
    b2 = pad2(params["b2"], 1, Hd_p)
    w3 = pad2(params["w3"] * params["s3"], Hd_p, Oup_p).astype(jnp.bfloat16)
    b3 = pad2(params["b3"], 1, Oup_p)

    # ---- single padded HBM input (bf16, lane-dense channels); no per-tile stack ----
    x_b = jnp.pad(x_nhwc, ((0, 0), (0, 0), (0, 0), (0, Cin_p - Cin))).astype(jnp.bfloat16)

    if stride == 1:
        THin, Wpp = THo + 2, cols_in
        Hin = Ho_pad + 2
        xin = jnp.pad(x_b, ((0, 0), (1, Hin - H - 1), (1, Wpp - W - 1), (0, 0)))
        tile_shape = (THin, Wpp, Cin_p)
    else:
        # de-interleave rows/cols into 4 parity planes once (one HBM pass)
        THr, Wh = THo + 1, cols_in
        Ipad = Ho_pad + 1
        Hp2, Wp2 = 2 * Ipad, 2 * Wh
        xpad = jnp.pad(x_b, ((0, 0), (1, Hp2 - H - 1), (1, Wp2 - W - 1), (0, 0)))
        xq = xpad.reshape(N, Ipad, 2, Wh, 2, Cin_p)
        xin = xq.transpose(0, 2, 4, 1, 3, 5).reshape(N, 4, Ipad, Wh, Cin_p)
        tile_shape = (4, THr, Wh, Cin_p)

    # ---- precomputed 0/1 padding masks (only needed when the 1x1 expand exists) ----
    mask = None
    if has_expand:
        if stride == 1:
            r, c = np.arange(THin), np.arange(Wpp)
            mts = []
            for t in range(T):
                gr = t * THo + r
                mts.append(np.outer((gr >= 1) & (gr <= H),
                                    (c >= 1) & (c <= W)).astype(np.float32))
            mask = jnp.asarray(np.stack(mts)[..., None])          # (T, THin, Wpp, 1)
            mask_block = (1, THin, Wpp, 1)
            mask_imap = lambda n, t: (t, 0, 0, 0)
        else:
            i, j = np.arange(THr), np.arange(Wh)
            mts = []
            for t in range(T):
                planes = []
                for p in range(4):
                    a, b = p // 2, p % 2
                    gr = 2 * (t * THo + i) + a
                    gc = 2 * j + b
                    planes.append(np.outer((gr >= 1) & (gr <= H),
                                           (gc >= 1) & (gc <= W)))
                mts.append(np.stack(planes))
            mask = jnp.asarray(np.stack(mts).astype(np.float32)[..., None])
            mask_block = (1, 4, THr, Wh, 1)                       # (T,4,THr,Wh,1)
            mask_imap = lambda n, t: (t, 0, 0, 0, 0)

    # ---- specs --------------------------------------------------------------
    def wspec(a):
        nd = a.ndim
        # TODO(synk): pl.Buffered(1) here would reclaim the dead second weight
        # buffer (mostly matters on v7x); left at the default for portability.
        return pl.BlockSpec(a.shape, lambda n, t, _nd=nd: (0,) * _nd)

    in_specs = [pl.BlockSpec(memory_space=pl.ANY)]
    call_args = [xin]
    if has_expand:
        in_specs += [pl.BlockSpec(mask_block, mask_imap), wspec(w1), wspec(b1)]
        call_args += [mask, w1, b1]
    in_specs += [wspec(wd), wspec(b2), wspec(w3), wspec(b3)]
    call_args += [wd, b2, w3, b3]

    out_spec = pl.BlockSpec((1, THo, Wo_p, Oup_p), lambda n, t: (n, t, 0, 0))

    kernel = _make_kernel(stride=stride, has_expand=has_expand, use_res=use_res,
                          THo=THo, R=tile_shape[-3], C=tile_shape[-2], Wo_p=Wo_p,
                          Cin_p=Cin_p, Hd_p=Hd_p, Oup_p=Oup_p, dw_dtype=dw_dtype)

    flops = 2 * 9 * Ho * Wo * hidden + 2 * Ho * Wo * hidden * oup
    if has_expand:
        flops += 2 * (H + 2) * (W + 2) * Cin * hidden
    flops *= N
    bytes_accessed = int(xin.size) * 2 + N * Ho_pad * Wo_p * Oup_p * 4
    for a in call_args[1:]:
        bytes_accessed += int(np.prod(a.shape)) * np.dtype(a.dtype).itemsize

    # Output kept in f32 to match the f32 reference check; emit bf16 here instead
    # if the downstream layer consumes bf16 (halves the output HBM write).
    out = pl.pallas_call(
        kernel,
        out_shape=jax.ShapeDtypeStruct((N, Ho_pad, Wo_p, Oup_p), jnp.float32),
        grid_spec=pltpu.PrefetchScalarGridSpec(
            num_scalar_prefetch=0,
            grid=(N, T),
            in_specs=in_specs,
            out_specs=out_spec,
            scratch_shapes=[pltpu.VMEM((2,) + tile_shape, jnp.bfloat16),
                            pltpu.SemaphoreType.DMA((2,))],
        ),
        compiler_params=pltpu.CompilerParams(
            # N is independent (megacore-shardable on v7x); the row-tile axis stays
            # sequential per image so the manual halo-window prefetch is valid.
            dimension_semantics=("parallel", "arbitrary"),
            vmem_limit_bytes=vmem_limit,
        ),
        cost_estimate=pl.CostEstimate(flops=int(flops), transcendentals=0,
                                      bytes_accessed=int(bytes_accessed)),
    )(*call_args)

    return out[:, :Ho, :Wo, :oup]


# ---------------------------------------------------------------------------
# Parameter init (deterministic, synthetic) + pure-JAX reference
# ---------------------------------------------------------------------------
def _bn_fold(key, dim, eps=1e-5):
    k1, k2, k3, k4 = jax.random.split(key, 4)
    gamma = jax.random.uniform(k1, (dim,), minval=0.8, maxval=1.2)
    beta = jax.random.normal(k2, (dim,)) * 0.1
    mean = jax.random.normal(k3, (dim,)) * 0.1
    var = jax.random.uniform(k4, (dim,), minval=0.5, maxval=1.5)
    scale = gamma / jnp.sqrt(var + eps)
    bias = beta - mean * scale
    return (scale.reshape(1, dim).astype(jnp.float32),
            bias.reshape(1, dim).astype(jnp.float32))


def init_params(key, inp, oup, expand_ratio):
    hidden = int(round(inp * expand_ratio))
    ks = jax.random.split(key, 6)
    p = {}
    if expand_ratio != 1:
        p["w1"] = (jax.random.normal(ks[0], (inp, hidden)) * 0.2).astype(jnp.float32)
        p["s1"], p["b1"] = _bn_fold(ks[1], hidden)
    p["wd"] = (jax.random.normal(ks[2], (9, hidden)) * 0.2).astype(jnp.float32)
    p["s2"], p["b2"] = _bn_fold(ks[3], hidden)
    p["w3"] = (jax.random.normal(ks[4], (hidden, oup)) * 0.2).astype(jnp.float32)
    p["s3"], p["b3"] = _bn_fold(ks[5], oup)
    return p, hidden


def ref_inverted_residual(x_nhwc, p, hidden, *, stride, expand_ratio, oup):
    Cin = x_nhwc.shape[-1]
    use_res = (stride == 1) and (Cin == oup)
    dn = ("NHWC", "HWIO", "NHWC")
    h = x_nhwc
    if expand_ratio != 1:
        h = lax.conv_general_dilated(h, p["w1"].reshape(1, 1, Cin, hidden),
                                     (1, 1), "VALID", dimension_numbers=dn)
        h = jnp.clip(h * p["s1"].reshape(1, 1, 1, hidden)
                     + p["b1"].reshape(1, 1, 1, hidden), 0.0, 6.0)
    wd = p["wd"].reshape(3, 3, 1, hidden)
    d = lax.conv_general_dilated(h, wd, (stride, stride), [(1, 1), (1, 1)],
                                 feature_group_count=hidden, dimension_numbers=dn)
    d = jnp.clip(d * p["s2"].reshape(1, 1, 1, hidden)
                 + p["b2"].reshape(1, 1, 1, hidden), 0.0, 6.0)
    y = lax.conv_general_dilated(d, p["w3"].reshape(1, 1, hidden, oup),
                                 (1, 1), "VALID", dimension_numbers=dn)
    y = y * p["s3"].reshape(1, 1, 1, oup) + p["b3"].reshape(1, 1, 1, oup)
    if use_res:
        y = y + x_nhwc
    return y


# ---------------------------------------------------------------------------
# Main
# ---------------------------------------------------------------------------
if __name__ == "__main__":
    key = jax.random.PRNGKey(0)

    configs = [
        # residual path (stride=1, inp==oup) with 1x1 expand; T=2 row tiles
        dict(inp=8, oup=8, stride=1, expand_ratio=4, H=16, W=16, max_out_rows=8),
        # expand_ratio == 1 branch (no 1x1 expand), no residual; single tile
        dict(inp=8, oup=16, stride=1, expand_ratio=1, H=16, W=16, max_out_rows=None),
        # stride=2 downsampling with expand (parity-plane layout); T=2
        dict(inp=8, oup=16, stride=2, expand_ratio=4, H=16, W=16, max_out_rows=4),
        # stride=2 without expand; single tile
        dict(inp=16, oup=16, stride=2, expand_ratio=1, H=16, W=16, max_out_rows=None),
        # non-divisor Ho and Wo not a multiple of 8 (padded output rows/cols path)
        dict(inp=8, oup=8, stride=1, expand_ratio=4, H=12, W=12, max_out_rows=8),
    ]

    N = 2
    for i, cfg in enumerate(configs):
        inp, oup = cfg["inp"], cfg["oup"]
        stride, er = cfg["stride"], cfg["expand_ratio"]
        Hs, Ws = cfg["H"], cfg["W"]

        kx_i, kp_i = jax.random.split(jax.random.fold_in(key, i))
        # PyTorch-style NCHW input, converted to NHWC (channels -> lanes) for TPU.
        x_nchw = jax.random.normal(kx_i, (N, inp, Hs, Ws), dtype=jnp.float32)
        x_nhwc = jnp.transpose(x_nchw, (0, 2, 3, 1))

        params, hidden = init_params(kp_i, inp, oup, er)

        out = inverted_residual_pallas(x_nhwc, params, hidden, stride=stride,
                                       expand_ratio=er, oup=oup,
                                       max_out_rows=cfg["max_out_rows"])
        out = jax.block_until_ready(out)

        ref = ref_inverted_residual(x_nhwc, params, hidden, stride=stride,
                                    expand_ratio=er, oup=oup)
        ref = jax.block_until_ready(ref)

        # bf16 MXU matmuls (and bf16 depthwise taps on v6e/v7x) vs f32 reference.
        np.testing.assert_allclose(np.asarray(out), np.asarray(ref),
                                   rtol=3e-2, atol=3e-2)

        _ = jnp.transpose(out, (0, 3, 1, 2))   # back to NCHW (PyTorch convention)

    print("KERNEL_OK")
</pallas_src>

<mosaic_0001>
module attributes {stable_mosaic.version = 11 : i64} {
  func.func @kernel(%arg0: i32, %arg1: i32, %arg2: memref<2x18x32x128xbf16, #tpu.memory_space<any>>, %arg3: memref<1x10x32x1xf32, #tpu.memory_space<vmem>>, %arg4: memref<128x128xbf16, #tpu.memory_space<vmem>>, %arg5: memref<1x128xf32, #tpu.memory_space<vmem>>, %arg6: memref<9x128xf32, #tpu.memory_space<vmem>>, %arg7: memref<1x128xf32, #tpu.memory_space<vmem>>, %arg8: memref<128x128xbf16, #tpu.memory_space<vmem>>, %arg9: memref<1x128xf32, #tpu.memory_space<vmem>>, %arg10: memref<1x8x16x128xf32, #tpu.memory_space<vmem>>, %arg11: memref<2x10x32x128xbf16, #tpu.memory_space<vmem>>, %arg12: memref<2x!tpu.dma_semaphore, #tpu.memory_space<semaphore_mem>>) attributes {dimension_semantics = [#tpu.dimension_semantics<parallel>, #tpu.dimension_semantics<arbitrary>], iteration_bounds = array<i64: 2, 2>, scalar_prefetch = 0 : i64, scratch_operands = 2 : i64, tpu.core_type = #tpu.core_type<tc>, window_params = [{}, {transform_indices = @transform_1, window_bounds = array<i64: 1, 10, 32, 1>}, {pipeline_mode = #tpu.pipeline_mode<synchronous>, transform_indices = @transform_2, window_bounds = array<i64: 128, 128>}, {pipeline_mode = #tpu.pipeline_mode<synchronous>, transform_indices = @transform_3, window_bounds = array<i64: 1, 128>}, {pipeline_mode = #tpu.pipeline_mode<synchronous>, transform_indices = @transform_4, window_bounds = array<i64: 9, 128>}, {pipeline_mode = #tpu.pipeline_mode<synchronous>, transform_indices = @transform_5, window_bounds = array<i64: 1, 128>}, {pipeline_mode = #tpu.pipeline_mode<synchronous>, transform_indices = @transform_6, window_bounds = array<i64: 128, 128>}, {pipeline_mode = #tpu.pipeline_mode<synchronous>, transform_indices = @transform_7, window_bounds = array<i64: 1, 128>}, {transform_indices = @transform_8, window_bounds = array<i64: 1, 8, 16, 128>}]} {
    %c2_i32 = arith.constant 2 : i32
    %c0_i32 = arith.constant 0 : i32
    %0 = arith.cmpi eq, %c2_i32, %c0_i32 : i32
    %c1_i32 = arith.constant 1 : i32
    %1 = arith.select %0, %c1_i32, %c2_i32 : i32
    %2 = arith.remsi %arg1, %1 : i32
    %c0_i32_0 = arith.constant 0 : i32
    %3 = arith.cmpi ne, %2, %c0_i32_0 : i32
    %c0_i32_1 = arith.constant 0 : i32
    %4 = arith.cmpi slt, %2, %c0_i32_1 : i32
    %c0_i32_2 = arith.constant 0 : i32
    %5 = arith.cmpi slt, %1, %c0_i32_2 : i32
    %6 = arith.xori %4, %5 : i1
    %7 = arith.andi %6, %3 : i1
    %8 = arith.addi %2, %1 : i32
    %9 = arith.select %7, %8, %2 : i32
    %c0_i32_3 = arith.constant 0 : i32
    %10 = arith.cmpi eq, %arg1, %c0_i32_3 : i32
    %11 = arith.extui %10 : i1 to i32
    %c0_i32_4 = arith.constant 0 : i32
    %12 = arith.cmpi ne, %11, %c0_i32_4 : i32
    scf.if %12 {
      %c8_i32_40 = arith.constant 8 : i32
      %121 = arith.muli %arg1, %c8_i32_40 : i32
      %c0_i32_41 = arith.constant 0 : i32
      %c0_i32_42 = arith.constant 0 : i32
      %122 = tpu.memref_slice %arg2[%arg0, %121, %c0_i32_41, %c0_i32_42] : memref<2x18x32x128xbf16, #tpu.memory_space<any>> -> memref<1x10x32x128xbf16, #tpu.memory_space<any>>
      %123 = tpu.memref_squeeze %122 : memref<1x10x32x128xbf16, #tpu.memory_space<any>> -> memref<10x32x128xbf16, #tpu.memory_space<any>>
      %c0_i32_43 = arith.constant 0 : i32
      %c0_i32_44 = arith.constant 0 : i32
      %c0_i32_45 = arith.constant 0 : i32
      %124 = tpu.memref_slice %arg11[%9, %c0_i32_43, %c0_i32_44, %c0_i32_45] : memref<2x10x32x128xbf16, #tpu.memory_space<vmem>> -> memref<1x10x32x128xbf16, #tpu.memory_space<vmem>>
      %125 = tpu.memref_squeeze %124 : memref<1x10x32x128xbf16, #tpu.memory_space<vmem>> -> memref<10x32x128xbf16, #tpu.memory_space<vmem>>
      %126 = tpu.memref_slice %arg12[%9] : memref<2x!tpu.dma_semaphore, #tpu.memory_space<semaphore_mem>> -> memref<1x!tpu.dma_semaphore, #tpu.memory_space<semaphore_mem>>
      %127 = tpu.memref_squeeze %126 : memref<1x!tpu.dma_semaphore, #tpu.memory_space<semaphore_mem>> -> memref<!tpu.dma_semaphore, #tpu.memory_space<semaphore_mem>>
      tpu.enqueue_dma source(%123 : memref<10x32x128xbf16, #tpu.memory_space<any>>) target(%125 : memref<10x32x128xbf16, #tpu.memory_space<vmem>>) target_semaphore(%127 : memref<!tpu.dma_semaphore, #tpu.memory_space<semaphore_mem>>)
    } else {
    }
    %c8_i32 = arith.constant 8 : i32
    %13 = arith.muli %arg1, %c8_i32 : i32
    %c0_i32_5 = arith.constant 0 : i32
    %c0_i32_6 = arith.constant 0 : i32
    %14 = tpu.memref_slice %arg2[%arg0, %13, %c0_i32_5, %c0_i32_6] : memref<2x18x32x128xbf16, #tpu.memory_space<any>> -> memref<1x10x32x128xbf16, #tpu.memory_space<any>>
    %15 = tpu.memref_squeeze %14 : memref<1x10x32x128xbf16, #tpu.memory_space<any>> -> memref<10x32x128xbf16, #tpu.memory_space<any>>
    %c0_i32_7 = arith.constant 0 : i32
    %c0_i32_8 = arith.constant 0 : i32
    %c0_i32_9 = arith.constant 0 : i32
    %16 = tpu.memref_slice %arg11[%9, %c0_i32_7, %c0_i32_8, %c0_i32_9] : memref<2x10x32x128xbf16, #tpu.memory_space<vmem>> -> memref<1x10x32x128xbf16, #tpu.memory_space<vmem>>
    %17 = tpu.memref_squeeze %16 : memref<1x10x32x128xbf16, #tpu.memory_space<vmem>> -> memref<10x32x128xbf16, #tpu.memory_space<vmem>>
    %18 = tpu.memref_slice %arg12[%9] : memref<2x!tpu.dma_semaphore, #tpu.memory_space<semaphore_mem>> -> memref<1x!tpu.dma_semaphore, #tpu.memory_space<semaphore_mem>>
    %19 = tpu.memref_squeeze %18 : memref<1x!tpu.dma_semaphore, #tpu.memory_space<semaphore_mem>> -> memref<!tpu.dma_semaphore, #tpu.memory_space<semaphore_mem>>
    tpu.wait_dma2 semaphore(%19 : memref<!tpu.dma_semaphore, #tpu.memory_space<semaphore_mem>>) src(%15 : memref<10x32x128xbf16, #tpu.memory_space<any>>) dst(%17 : memref<10x32x128xbf16, #tpu.memory_space<vmem>>)
    %c1_i32_10 = arith.constant 1 : i32
    %20 = arith.addi %arg1, %c1_i32_10 : i32
    %c2_i32_11 = arith.constant 2 : i32
    %21 = arith.cmpi slt, %20, %c2_i32_11 : i32
    %22 = arith.extui %21 : i1 to i32
    %c0_i32_12 = arith.constant 0 : i32
    %23 = arith.cmpi ne, %22, %c0_i32_12 : i32
    scf.if %23 {
      %c1_i32_40 = arith.constant 1 : i32
      %121 = arith.addi %arg1, %c1_i32_40 : i32
      %c1_i32_41 = arith.constant 1 : i32
      %122 = arith.subi %c1_i32_41, %9 : i32
      %c8_i32_42 = arith.constant 8 : i32
      %123 = arith.muli %121, %c8_i32_42 : i32
      %c0_i32_43 = arith.constant 0 : i32
      %c0_i32_44 = arith.constant 0 : i32
      %124 = tpu.memref_slice %arg2[%arg0, %123, %c0_i32_43, %c0_i32_44] : memref<2x18x32x128xbf16, #tpu.memory_space<any>> -> memref<1x10x32x128xbf16, #tpu.memory_space<any>>
      %125 = tpu.memref_squeeze %124 : memref<1x10x32x128xbf16, #tpu.memory_space<any>> -> memref<10x32x128xbf16, #tpu.memory_space<any>>
      %c0_i32_45 = arith.constant 0 : i32
      %c0_i32_46 = arith.constant 0 : i32
      %c0_i32_47 = arith.constant 0 : i32
      %126 = tpu.memref_slice %arg11[%122, %c0_i32_45, %c0_i32_46, %c0_i32_47] : memref<2x10x32x128xbf16, #tpu.memory_space<vmem>> -> memref<1x10x32x128xbf16, #tpu.memory_space<vmem>>
      %127 = tpu.memref_squeeze %126 : memref<1x10x32x128xbf16, #tpu.memory_space<vmem>> -> memref<10x32x128xbf16, #tpu.memory_space<vmem>>
      %128 = tpu.memref_slice %arg12[%122] : memref<2x!tpu.dma_semaphore, #tpu.memory_space<semaphore_mem>> -> memref<1x!tpu.dma_semaphore, #tpu.memory_space<semaphore_mem>>
      %129 = tpu.memref_squeeze %128 : memref<1x!tpu.dma_semaphore, #tpu.memory_space<semaphore_mem>> -> memref<!tpu.dma_semaphore, #tpu.memory_space<semaphore_mem>>
      tpu.enqueue_dma source(%125 : memref<10x32x128xbf16, #tpu.memory_space<any>>) target(%127 : memref<10x32x128xbf16, #tpu.memory_space<vmem>>) target_semaphore(%129 : memref<!tpu.dma_semaphore, #tpu.memory_space<semaphore_mem>>)
    } else {
    }
    %24 = arith.index_cast %9 : i32 to index
    %c0 = arith.constant 0 : index
    %c0_13 = arith.constant 0 : index
    %c0_14 = arith.constant 0 : index
    %25 = vector.load %arg11[%24, %c0, %c0_13, %c0_14] : memref<2x10x32x128xbf16, #tpu.memory_space<vmem>>, vector<1x10x32x128xbf16>
    %26 = vector.shape_cast %25 : vector<1x10x32x128xbf16> to vector<10x32x128xbf16>
    %27 = vector.shape_cast %26 : vector<10x32x128xbf16> to vector<320x128xbf16>
    %c0_15 = arith.constant 0 : index
    %c0_16 = arith.constant 0 : index
    %28 = vector.load %arg4[%c0_15, %c0_16] : memref<128x128xbf16, #tpu.memory_space<vmem>>, vector<128x128xbf16>
    %cst = arith.constant dense<0.000000e+00> : vector<320x128xf32>
    %29 = tpu.matmul %27, %28, %cst {dimension_numbers = #tpu.dot_dimension_numbers<[1], [0], [0], [1], [0, 0, 1, 1], [], []>} : vector<320x128xbf16>, vector<128x128xbf16>, vector<320x128xf32> -> vector<320x128xf32>
    %c0_17 = arith.constant 0 : index
    %c0_18 = arith.constant 0 : index
    %30 = vector.load %arg5[%c0_17, %c0_18] : memref<1x128xf32, #tpu.memory_space<vmem>>, vector<1x128xf32>
    %31 = vector.broadcast %30 : vector<1x128xf32> to vector<320x128xf32>
    %32 = arith.addf %29, %31 : vector<320x128xf32>
    %cst_19 = arith.constant 0.000000e+00 : f32
    %cst_20 = arith.constant 6.000000e+00 : f32
    %33 = vector.broadcast %cst_19 : f32 to vector<320x128xf32>
    %34 = arith.maximumf %33, %32 : vector<320x128xf32>
    %35 = vector.broadcast %cst_20 : f32 to vector<320x128xf32>
    %36 = arith.minimumf %35, %34 : vector<320x128xf32>
    %37 = vector.shape_cast %36 : vector<320x128xf32> to vector<10x32x128xf32>
    %c0_21 = arith.constant 0 : index
    %c0_22 = arith.constant 0 : index
    %c0_23 = arith.constant 0 : index
    %c0_24 = arith.constant 0 : index
    %38 = vector.load %arg3[%c0_21, %c0_22, %c0_23, %c0_24] : memref<1x10x32x1xf32, #tpu.memory_space<vmem>>, vector<1x10x32x1xf32>
    %39 = vector.shape_cast %38 : vector<1x10x32x1xf32> to vector<10x32x1xf32>
    %40 = vector.broadcast %39 : vector<10x32x1xf32> to vector<10x32x128xf32>
    %41 = arith.mulf %37, %40 : vector<10x32x128xf32>
    %c0_25 = arith.constant 0 : index
    %c0_26 = arith.constant 0 : index
    %42 = vector.load %arg6[%c0_25, %c0_26] : memref<9x128xf32, #tpu.memory_space<vmem>>, vector<9x128xf32>
    %c0_27 = arith.constant 0 : index
    %c0_28 = arith.constant 0 : index
    %43 = vector.load %arg7[%c0_27, %c0_28] : memref<1x128xf32, #tpu.memory_space<vmem>>, vector<1x128xf32>
    %44 = vector.extract_strided_slice %41 {offsets = [0, 0, 0], sizes = [10, 16, 128], strides = [1, 1, 1]} : vector<10x32x128xf32> to vector<10x16x128xf32>
    %45 = vector.extract_strided_slice %44 {offsets = [0, 0, 0], sizes = [8, 16, 128], strides = [1, 1, 1]} : vector<10x16x128xf32> to vector<8x16x128xf32>
    %46 = vector.extract_strided_slice %42 {offsets = [0, 0], sizes = [1, 128], strides = [1, 1]} : vector<9x128xf32> to vector<1x128xf32>
    %47 = vector.shape_cast %46 : vector<1x128xf32> to vector<1x1x128xf32>
    %48 = vector.broadcast %47 : vector<1x1x128xf32> to vector<8x16x128xf32>
    %49 = arith.mulf %45, %48 : vector<8x16x128xf32>
    %50 = vector.shape_cast %43 : vector<1x128xf32> to vector<1x1x128xf32>
    %51 = vector.broadcast %50 : vector<1x1x128xf32> to vector<8x16x128xf32>
    %52 = arith.addf %49, %51 : vector<8x16x128xf32>
    %53 = vector.extract_strided_slice %44 {offsets = [1, 0, 0], sizes = [8, 16, 128], strides = [1, 1, 1]} : vector<10x16x128xf32> to vector<8x16x128xf32>
    %54 = vector.extract_strided_slice %42 {offsets = [3, 0], sizes = [1, 128], strides = [1, 1]} : vector<9x128xf32> to vector<1x128xf32>
    %55 = vector.shape_cast %54 : vector<1x128xf32> to vector<1x1x128xf32>
    %56 = vector.broadcast %55 : vector<1x1x128xf32> to vector<8x16x128xf32>
    %57 = arith.mulf %53, %56 : vector<8x16x128xf32>
    %58 = arith.addf %52, %57 : vector<8x16x128xf32>
    %59 = vector.extract_strided_slice %44 {offsets = [2, 0, 0], sizes = [8, 16, 128], strides = [1, 1, 1]} : vector<10x16x128xf32> to vector<8x16x128xf32>
    %60 = vector.extract_strided_slice %42 {offsets = [6, 0], sizes = [1, 128], strides = [1, 1]} : vector<9x128xf32> to vector<1x128xf32>
    %61 = vector.shape_cast %60 : vector<1x128xf32> to vector<1x1x128xf32>
    %62 = vector.broadcast %61 : vector<1x1x128xf32> to vector<8x16x128xf32>
    %63 = arith.mulf %59, %62 : vector<8x16x128xf32>
    %64 = arith.addf %58, %63 : vector<8x16x128xf32>
    %65 = vector.extract_strided_slice %41 {offsets = [0, 1, 0], sizes = [10, 16, 128], strides = [1, 1, 1]} : vector<10x32x128xf32> to vector<10x16x128xf32>
    %66 = vector.extract_strided_slice %65 {offsets = [0, 0, 0], sizes = [8, 16, 128], strides = [1, 1, 1]} : vector<10x16x128xf32> to vector<8x16x128xf32>
    %67 = vector.extract_strided_slice %42 {offsets = [1, 0], sizes = [1, 128], strides = [1, 1]} : vector<9x128xf32> to vector<1x128xf32>
    %68 = vector.shape_cast %67 : vector<1x128xf32> to vector<1x1x128xf32>
    %69 = vector.broadcast %68 : vector<1x1x128xf32> to vector<8x16x128xf32>
    %70 = arith.mulf %66, %69 : vector<8x16x128xf32>
    %71 = arith.addf %64, %70 : vector<8x16x128xf32>
    %72 = vector.extract_strided_slice %65 {offsets = [1, 0, 0], sizes = [8, 16, 128], strides = [1, 1, 1]} : vector<10x16x128xf32> to vector<8x16x128xf32>
    %73 = vector.extract_strided_slice %42 {offsets = [4, 0], sizes = [1, 128], strides = [1, 1]} : vector<9x128xf32> to vector<1x128xf32>
    %74 = vector.shape_cast %73 : vector<1x128xf32> to vector<1x1x128xf32>
    %75 = vector.broadcast %74 : vector<1x1x128xf32> to vector<8x16x128xf32>
    %76 = arith.mulf %72, %75 : vector<8x16x128xf32>
    %77 = arith.addf %71, %76 : vector<8x16x128xf32>
    %78 = vector.extract_strided_slice %65 {offsets = [2, 0, 0], sizes = [8, 16, 128], strides = [1, 1, 1]} : vector<10x16x128xf32> to vector<8x16x128xf32>
    %79 = vector.extract_strided_slice %42 {offsets = [7, 0], sizes = [1, 128], strides = [1, 1]} : vector<9x128xf32> to vector<1x128xf32>
    %80 = vector.shape_cast %79 : vector<1x128xf32> to vector<1x1x128xf32>
    %81 = vector.broadcast %80 : vector<1x1x128xf32> to vector<8x16x128xf32>
    %82 = arith.mulf %78, %81 : vector<8x16x128xf32>
    %83 = arith.addf %77, %82 : vector<8x16x128xf32>
    %84 = vector.extract_strided_slice %41 {offsets = [0, 2, 0], sizes = [10, 16, 128], strides = [1, 1, 1]} : vector<10x32x128xf32> to vector<10x16x128xf32>
    %85 = vector.extract_strided_slice %84 {offsets = [0, 0, 0], sizes = [8, 16, 128], strides = [1, 1, 1]} : vector<10x16x128xf32> to vector<8x16x128xf32>
    %86 = vector.extract_strided_slice %42 {offsets = [2, 0], sizes = [1, 128], strides = [1, 1]} : vector<9x128xf32> to vector<1x128xf32>
    %87 = vector.shape_cast %86 : vector<1x128xf32> to vector<1x1x128xf32>
    %88 = vector.broadcast %87 : vector<1x1x128xf32> to vector<8x16x128xf32>
    %89 = arith.mulf %85, %88 : vector<8x16x128xf32>
    %90 = arith.addf %83, %89 : vector<8x16x128xf32>
    %91 = vector.extract_strided_slice %84 {offsets = [1, 0, 0], sizes = [8, 16, 128], strides = [1, 1, 1]} : vector<10x16x128xf32> to vector<8x16x128xf32>
    %92 = vector.extract_strided_slice %42 {offsets = [5, 0], sizes = [1, 128], strides = [1, 1]} : vector<9x128xf32> to vector<1x128xf32>
    %93 = vector.shape_cast %92 : vector<1x128xf32> to vector<1x1x128xf32>
    %94 = vector.broadcast %93 : vector<1x1x128xf32> to vector<8x16x128xf32>
    %95 = arith.mulf %91, %94 : vector<8x16x128xf32>
    %96 = arith.addf %90, %95 : vector<8x16x128xf32>
    %97 = vector.extract_strided_slice %84 {offsets = [2, 0, 0], sizes = [8, 16, 128], strides = [1, 1, 1]} : vector<10x16x128xf32> to vector<8x16x128xf32>
    %98 = vector.extract_strided_slice %42 {offsets = [8, 0], sizes = [1, 128], strides = [1, 1]} : vector<9x128xf32> to vector<1x128xf32>
    %99 = vector.shape_cast %98 : vector<1x128xf32> to vector<1x1x128xf32>
    %100 = vector.broadcast %99 : vector<1x1x128xf32> to vector<8x16x128xf32>
    %101 = arith.mulf %97, %100 : vector<8x16x128xf32>
    %102 = arith.addf %96, %101 : vector<8x16x128xf32>
    %cst_29 = arith.constant 0.000000e+00 : f32
    %cst_30 = arith.constant 6.000000e+00 : f32
    %103 = vector.broadcast %cst_29 : f32 to vector<8x16x128xf32>
    %104 = arith.maximumf %103, %102 : vector<8x16x128xf32>
    %105 = vector.broadcast %cst_30 : f32 to vector<8x16x128xf32>
    %106 = arith.minimumf %105, %104 : vector<8x16x128xf32>
    %107 = vector.shape_cast %106 : vector<8x16x128xf32> to vector<128x128xf32>
    %108 = arith.truncf %107 : vector<128x128xf32> to vector<128x128xbf16>
    %c0_31 = arith.constant 0 : index
    %c0_32 = arith.constant 0 : index
    %109 = vector.load %arg8[%c0_31, %c0_32] : memref<128x128xbf16, #tpu.memory_space<vmem>>, vector<128x128xbf16>
    %cst_33 = arith.constant dense<0.000000e+00> : vector<128x128xf32>
    %110 = tpu.matmul %108, %109, %cst_33 {dimension_numbers = #tpu.dot_dimension_numbers<[1], [0], [0], [1], [0, 0, 1, 1], [], []>} : vector<128x128xbf16>, vector<128x128xbf16>, vector<128x128xf32> -> vector<128x128xf32>
    %c0_34 = arith.constant 0 : index
    %c0_35 = arith.constant 0 : index
    %111 = vector.load %arg9[%c0_34, %c0_35] : memref<1x128xf32, #tpu.memory_space<vmem>>, vector<1x128xf32>
    %112 = vector.broadcast %111 : vector<1x128xf32> to vector<128x128xf32>
    %113 = arith.addf %110, %112 : vector<128x128xf32>
    %114 = vector.shape_cast %113 : vector<128x128xf32> to vector<8x16x128xf32>
    %115 = vector.extract_strided_slice %26 {offsets = [1, 1, 0], sizes = [8, 16, 128], strides = [1, 1, 1]} : vector<10x32x128xbf16> to vector<8x16x128xbf16>
    %116 = arith.extf %115 : vector<8x16x128xbf16> to vector<8x16x128xf32>
    %117 = arith.addf %114, %116 : vector<8x16x128xf32>
    %c0_36 = arith.constant 0 : index
    %c0_37 = arith.constant 0 : index
    %c0_38 = arith.constant 0 : index
    %c0_39 = arith.constant 0 : index
    %118 = vector.load %arg10[%c0_36, %c0_37, %c0_38, %c0_39] : memref<1x8x16x128xf32, #tpu.memory_space<vmem>>, vector<1x8x16x128xf32>
    %119 = vector.shape_cast %118 : vector<1x8x16x128xf32> to vector<8x16x128xf32>
    %120 = vector.shape_cast %117 : vector<8x16x128xf32> to vector<1x8x16x128xf32>
    tpu.vector_store %arg10[%c0_36, %c0_37, %c0_38, %c0_39], %120 {strides = array<i32>} : memref<1x8x16x128xf32, #tpu.memory_space<vmem>>, vector<1x8x16x128xf32>,
    return
  }
  func.func @transform_1(%arg0: i32, %arg1: i32) -> (i32, i32, i32, i32) {
    %c0_i32 = arith.constant 0 : i32
    %c0_i32_0 = arith.constant 0 : i32
    %c0_i32_1 = arith.constant 0 : i32
    %c0_i32_2 = arith.constant 0 : i32
    return %arg1, %c0_i32, %c0_i32_0, %c0_i32_1 : i32, i32, i32, i32
  }
  func.func @transform_2(%arg0: i32, %arg1: i32) -> (i32, i32) {
    %c0_i32 = arith.constant 0 : i32
    %c0_i32_0 = arith.constant 0 : i32
    %c0_i32_1 = arith.constant 0 : i32
    return %c0_i32, %c0_i32_0 : i32, i32
  }
  func.func @transform_3(%arg0: i32, %arg1: i32) -> (i32, i32) {
    %c0_i32 = arith.constant 0 : i32
    %c0_i32_0 = arith.constant 0 : i32
    %c0_i32_1 = arith.constant 0 : i32
    return %c0_i32, %c0_i32_0 : i32, i32
  }
  func.func @transform_4(%arg0: i32, %arg1: i32) -> (i32, i32) {
    %c0_i32 = arith.constant 0 : i32
    %c0_i32_0 = arith.constant 0 : i32
    %c0_i32_1 = arith.constant 0 : i32
    return %c0_i32, %c0_i32_0 : i32, i32
  }
  func.func @transform_5(%arg0: i32, %arg1: i32) -> (i32, i32) {
    %c0_i32 = arith.constant 0 : i32
    %c0_i32_0 = arith.constant 0 : i32
    %c0_i32_1 = arith.constant 0 : i32
    return %c0_i32, %c0_i32_0 : i32, i32
  }
  func.func @transform_6(%arg0: i32, %arg1: i32) -> (i32, i32) {
    %c0_i32 = arith.constant 0 : i32
    %c0_i32_0 = arith.constant 0 : i32
    %c0_i32_1 = arith.constant 0 : i32
    return %c0_i32, %c0_i32_0 : i32, i32
  }
  func.func @transform_7(%arg0: i32, %arg1: i32) -> (i32, i32) {
    %c0_i32 = arith.constant 0 : i32
    %c0_i32_0 = arith.constant 0 : i32
    %c0_i32_1 = arith.constant 0 : i32
    return %c0_i32, %c0_i32_0 : i32, i32
  }
  func.func @transform_8(%arg0: i32, %arg1: i32) -> (i32, i32, i32, i32) {
    %c0_i32 = arith.constant 0 : i32
    %c0_i32_0 = arith.constant 0 : i32
    %c0_i32_1 = arith.constant 0 : i32
    return %arg0, %arg1, %c0_i32, %c0_i32_0 : i32, i32, i32, i32
  }
}

</mosaic_0001>

<llo_original>
// kernel: tpu_custom_call.1
$region0: #{tpu_custom_call.1}
  #allocation0 [shape = 'u32[]', space=smem, size = 0x4, offset = 0x4, fixed_abs, tag = 'smem constant byte address 0x4 - core index']
  #allocation1 [shape = 'u32[144,128]{1,0:T(1,128)}', space=vmem, size = 0x12000, scoped, tag = 'internal scratch']
  #allocation2 [shape = 'bf16[2,10,32,128]{3,2,1,0:T(8,128)(2,1)}', space=vmem, size = 0x28000, scoped, tag = 'scratch operand']
  #allocation3 [shape = 's32[2]{0}', space=sflag, size = 0x8, scoped, tag = 'scratch operand']
  #allocation8 [shape = 's32[]', space=sflag, size = 0x4, offset = 0, fixed_abs, tag = 'sflag constant byte address 0x0 - dummy sync flag']
  #allocation9 [shape = 's32[]', space=sflag, size = 0x4, offset = 0, fixed_abs, tag = 'sflag constant byte address 0x0 - dummy sync flag']
  %s0 = inlined_call_operand.vmem [shape: bf16[2,18,32,128], index: 0, kind: input, shape index: {}]
  %s1 = inlined_call_operand.vmem [shape: f32[2,10,32,1], index: 1, kind: input, shape index: {}]
  %s2 = inlined_call_operand.vmem [shape: bf16[128,128], index: 2, kind: input, shape index: {}]
  %s3 = inlined_call_operand.vmem [shape: f32[1,128], index: 3, kind: input, shape index: {}]
  %s4 = inlined_call_operand.vmem [shape: f32[9,128], index: 4, kind: input, shape index: {}]
  %s5 = inlined_call_operand.vmem [shape: f32[1,128], index: 5, kind: input, shape index: {}]
  %s6 = inlined_call_operand.hbm [shape: bf16[128,128], index: 6, kind: input, shape index: {}]
  %s7 = inlined_call_operand.vmem [shape: f32[1,128], index: 7, kind: input, shape index: {}]
  %s8 = inlined_call_operand.hbm [shape: f32[2,16,16,128], index: 8, kind: output, shape index: {}]
  %s9 = sld [smem:[#allocation0]]
  $region141: #{tpu_custom_call.1} parent=0
    _
  %s11 = ssub.s32 1, %s9
  %s12 = scalar_select 0, %s11, %s9
  $region1: #{tpu_custom_call.1} parent=0
    #allocation4 [shape = 'u8[32768]{0}', space=vmem, size = 0x8000, scoped, tag = 'input window, operand 6, single buffered']
    #allocation5 [shape = 's32[2]{0}', space=sflag, size = 0x8, scoped, tag = 'scoped memory for tpu_custom_call.1']
    #allocation6 [shape = 's32[2]{0}', space=sflag, size = 0x8, scoped, tag = 'scoped memory for tpu_custom_call.1']
    #allocation7 [shape = 'u8[131072]{0}', space=vmem, size = 0x20000, scoped, tag = 'output window, operand 0']
    %13 = vsyncpa [#allocation5], 0
    %14 = vsyncpa [#allocation6], 0
    %s15 = scalar_lea.sflag [#allocation6], 1
    %16 = vsyncpa %s15, 0
    loop: start=0, step=1, limit=6
    $region2: #{tpu_custom_call.1} parent=1 // loop_pre_header
      _
    $region3: #{tpu_custom_call.1} parent=1 // loop_header
      %s18 = sphi 0, %s22
      %p19 = scmp.ge.s32.totalorder %s18, 6
      %s25 = sphi 0, %s37
      %s26 = sphi 0, %s33
      %s27 = sphi 0, %s25
      %s28 = sphi 0, %s26
      %s29 = sphi 0, %s27
      %s30 = sphi 0, %s28
      %s40 = sphi 0, %s42
      %s43 = sphi 0, %s40
      %s44 = sphi 0, %s43
      %s60 = sphi 0, %s44
      %s64 = sphi 0, %s64
      %s66 = sphi 0, %s64
      %s67 = sphi 0, %s66
      %s81 = sphi 0, %s67
      %s85 = sphi 0, %s85
      %s87 = sphi 0, %s85
      %s88 = sphi 0, %s87
      %s102 = sphi 0, %s88
      %s106 = sphi 0, %s106
      %s108 = sphi 0, %s106
      %s109 = sphi 0, %s108
      %s123 = sphi 0, %s109
      %s127 = sphi 0, %s127
      %s129 = sphi 0, %s127
      %s130 = sphi 0, %s129
      %s144 = sphi 0, %s130
      %s148 = sphi 0, %s148
      %s150 = sphi 0, %s148
      %s151 = sphi 0, %s150
      %s165 = sphi 0, %s151
      %s169 = sphi 0, %s169
      %s171 = sphi 0, %s169
      %s172 = sphi 0, %s171
      %s186 = sphi 0, %s172
      %s194 = sphi 0, %s196
      %s197 = sphi 0, %s194
      %s198 = sphi 0, %s197
      %s214 = sphi 0, %s198
    $region4: #{tpu_custom_call.1} parent=1 // loop_header_branch
      %21 = sbr.rel (%p19) target = $region8
    $region5: #{tpu_custom_call.1} parent=1 // loop_body
      %s23 = ssub.s32 %s18, 1
      %s24 = ssub.s32 %s18, 2
      %s31 = sadd.s32 1, %s26
      %p32 = scmp.ge.s32.totalorder %s31, 2
      %s33 = scalar_select %p32, 0, %s31
      %s34 = sadd.s32 1, %s25
      %s35 = scalar_select %p32, %s34, %s25
      %p36 = scmp.ge.s32.totalorder %s35, 2
      %s37 = scalar_select %p36, 0, %s35
      %s38 = ssub.s32 %s26, %s33
      %p39 = scmp.eq.s32.totalorder %s38, 0
      %s41 = sadd.s32 %s40, 1
      %s42 = scalar_select %p39, %s40, %s41
      %p45 = pneg %p39
      %p46 = scmp.eq.s32.totalorder %s18, 3
      %p47 = por %p45, %p46
      %p48 = scmp.ne.s32.totalorder %s40, %s43
      %p49 = scmp.eq.s32.totalorder %s18, 0
      %p50 = por %p48, %p49
      %p51 = scmp.ne.s32.totalorder %s40, %s43
      %p52 = scmp.eq.s32.totalorder %s23, 3
      %p53 = por %p51, %p52
      %p54 = scmp.ne.s32.totalorder %s43, %s44
      %p55 = scmp.eq.s32.totalorder %s23, 0
      %p56 = por %p54, %p55
      %p57 = scmp.ne.s32.totalorder %s43, %s44
      %p58 = scmp.eq.s32.totalorder %s24, 3
      %p59 = por %p57, %p58
      %p61 = scmp.ne.s32.totalorder %s44, %s60
      %p62 = scmp.eq.s32.totalorder %s24, 0
      %p63 = por %p61, %p62
      %s65 = sadd.s32 %s64, 1
      %p68 = scmp.eq.s32.totalorder %s18, 3
      %p69 = scmp.ne.s32.totalorder %s64, %s66
      %p70 = scmp.eq.s32.totalorder %s18, 0
      %p71 = por %p69, %p70
      %p72 = scmp.ne.s32.totalorder %s64, %s66
      %p73 = scmp.eq.s32.totalorder %s23, 3
      %p74 = por %p72, %p73
      %p75 = scmp.ne.s32.totalorder %s66, %s67
      %p76 = scmp.eq.s32.totalorder %s23, 0
      %p77 = por %p75, %p76
      %p78 = scmp.ne.s32.totalorder %s66, %s67
      %p79 = scmp.eq.s32.totalorder %s24, 3
      %p80 = por %p78, %p79
      %p82 = scmp.ne.s32.totalorder %s67, %s81
      %p83 = scmp.eq.s32.totalorder %s24, 0
      %p84 = por %p82, %p83
      %s86 = sadd.s32 %s85, 1
      %p89 = scmp.eq.s32.totalorder %s18, 3
      %p90 = scmp.ne.s32.totalorder %s85, %s87
      %p91 = scmp.eq.s32.totalorder %s18, 0
      %p92 = por %p90, %p91
      %p93 = scmp.ne.s32.totalorder %s85, %s87
      %p94 = scmp.eq.s32.totalorder %s23, 3
      %p95 = por %p93, %p94
      %p96 = scmp.ne.s32.totalorder %s87, %s88
      %p97 = scmp.eq.s32.totalorder %s23, 0
      %p98 = por %p96, %p97
      %p99 = scmp.ne.s32.totalorder %s87, %s88
      %p100 = scmp.eq.s32.totalorder %s24, 3
      %p101 = por %p99, %p100
      %p103 = scmp.ne.s32.totalorder %s88, %s102
      %p104 = scmp.eq.s32.totalorder %s24, 0
      %p105 = por %p103, %p104
      %s107 = sadd.s32 %s106, 1
      %p110 = scmp.eq.s32.totalorder %s18, 3
      %p111 = scmp.ne.s32.totalorder %s106, %s108
      %p112 = scmp.eq.s32.totalorder %s18, 0
      %p113 = por %p111, %p112
      %p114 = scmp.ne.s32.totalorder %s106, %s108
      %p115 = scmp.eq.s32.totalorder %s23, 3
      %p116 = por %p114, %p115
      %p117 = scmp.ne.s32.totalorder %s108, %s109
      %p118 = scmp.eq.s32.totalorder %s23, 0
      %p119 = por %p117, %p118
      %p120 = scmp.ne.s32.totalorder %s108, %s109
      %p121 = scmp.eq.s32.totalorder %s24, 3
      %p122 = por %p120, %p121
      %p124 = scmp.ne.s32.totalorder %s109, %s123
      %p125 = scmp.eq.s32.totalorder %s24, 0
      %p126 = por %p124, %p125
      %s128 = sadd.s32 %s127, 1
      %p131 = scmp.eq.s32.totalorder %s18, 3
      %p132 = scmp.ne.s32.totalorder %s127, %s129
      %p133 = scmp.eq.s32.totalorder %s18, 0
      %p134 = por %p132, %p133
      %p135 = scmp.ne.s32.totalorder %s127, %s129
      %p136 = scmp.eq.s32.totalorder %s23, 3
      %p137 = por %p135, %p136
      %p138 = scmp.ne.s32.totalorder %s129, %s130
      %p139 = scmp.eq.s32.totalorder %s23, 0
      %p140 = por %p138, %p139
      %p141 = scmp.ne.s32.totalorder %s129, %s130
      %p142 = scmp.eq.s32.totalorder %s24, 3
      %p143 = por %p141, %p142
      %p145 = scmp.ne.s32.totalorder %s130, %s144
      %p146 = scmp.eq.s32.totalorder %s24, 0
      %p147 = por %p145, %p146
      %s149 = sadd.s32 %s148, 1
      %p152 = scmp.eq.s32.totalorder %s18, 3
      %p153 = scmp.ne.s32.totalorder %s148, %s150
      %p154 = scmp.eq.s32.totalorder %s18, 0
      %p155 = por %p153, %p154
      %p156 = scmp.ne.s32.totalorder %s148, %s150
      %p157 = scmp.eq.s32.totalorder %s23, 3
      %p158 = por %p156, %p157
      %p159 = scmp.ne.s32.totalorder %s150, %s151
      %p160 = scmp.eq.s32.totalorder %s23, 0
      %p161 = por %p159, %p160
      %p162 = scmp.ne.s32.totalorder %s150, %s151
      %p163 = scmp.eq.s32.totalorder %s24, 3
      %p164 = por %p162, %p163
      %p166 = scmp.ne.s32.totalorder %s151, %s165
      %p167 = scmp.eq.s32.totalorder %s24, 0
      %p168 = por %p166, %p167
      %s170 = sadd.s32 %s169, 1
      %p173 = scmp.eq.s32.totalorder %s18, 3
      %p174 = scmp.ne.s32.totalorder %s169, %s171
      %p175 = scmp.eq.s32.totalorder %s18, 0
      %p176 = por %p174, %p175
      %p177 = scmp.ne.s32.totalorder %s169, %s171
      %p178 = scmp.eq.s32.totalorder %s23, 3
      %p179 = por %p177, %p178
      %p180 = scmp.ne.s32.totalorder %s171, %s172
      %p181 = scmp.eq.s32.totalorder %s23, 0
      %p182 = por %p180, %p181
      %p183 = scmp.ne.s32.totalorder %s171, %s172
      %p184 = scmp.eq.s32.totalorder %s24, 3
      %p185 = por %p183, %p184
      %p187 = scmp.ne.s32.totalorder %s172, %s186
      %p188 = scmp.eq.s32.totalorder %s24, 0
      %p189 = por %p187, %p188
      %s190 = ssub.s32 %s25, %s37
      %s191 = ssub.s32 %s26, %s33
      %s192 = sor.u32 %s190, %s191
      %p193 = scmp.eq.s32.totalorder %s192, 0
      %s195 = sadd.s32 %s194, 1
      %s196 = scalar_select %p193, %s194, %s195
      %p199 = pneg %p193
      %p200 = scmp.eq.s32.totalorder %s18, 3
      %p201 = por %p199, %p200
      %p202 = scmp.ne.s32.totalorder %s194, %s197
      %p203 = scmp.eq.s32.totalorder %s18, 0
      %p204 = por %p202, %p203
      %p205 = scmp.ne.s32.totalorder %s194, %s197
      %p206 = scmp.eq.s32.totalorder %s23, 3
      %p207 = por %p205, %p206
      %p208 = scmp.ne.s32.totalorder %s197, %s198
      %p209 = scmp.eq.s32.totalorder %s23, 0
      %p210 = por %p208, %p209
      %p211 = scmp.ne.s32.totalorder %s197, %s198
      %p212 = scmp.eq.s32.totalorder %s24, 3
      %p213 = por %p211, %p212
      %p215 = scmp.ne.s32.totalorder %s198, %s214
      %p216 = scmp.eq.s32.totalorder %s24, 0
      %p217 = por %p215, %p216
      %p218 = scmp.le.s32.totalorder 1, %s18
      %p219 = scmp.lt.s32.totalorder %s18, 5
      %p220 = pnand %p218, %p219
      %p221 = pneg %p220
      // Predicated region
      $region9: #{tpu_custom_call.1} parent=5 // pred_check
        _
      $region10: #{tpu_custom_call.1} parent=5 // pred_check_branch
        %223 = sbr.rel (%p220) target = $region12
      $region11: #{tpu_custom_call.1} parent=5 // pred_region
        %s224 = ssub.s32 %s18, 1
        // Predicated region
        $region13: #{tpu_custom_call.1} parent=11 // pred_check
          %p225 = pneg %p77
        $region14: #{tpu_custom_call.1} parent=11 // pred_check_branch
          %227 = sbr.rel (%p225) target = $region16
        $region15: #{tpu_custom_call.1} parent=11 // pred_region
          _
        $region16: #{tpu_custom_call.1} parent=11 // pred_fallthru
          _
        // Predicated region
        $region17: #{tpu_custom_call.1} parent=11 // pred_check
          %p228 = pneg %p98
        $region18: #{tpu_custom_call.1} parent=11 // pred_check_branch
          %230 = sbr.rel (%p228) target = $region20
        $region19: #{tpu_custom_call.1} parent=11 // pred_region
          _
        $region20: #{tpu_custom_call.1} parent=11 // pred_fallthru
          _
        // Predicated region
        $region21: #{tpu_custom_call.1} parent=11 // pred_check
          %p231 = pneg %p119
        $region22: #{tpu_custom_call.1} parent=11 // pred_check_branch
          %233 = sbr.rel (%p231) target = $region24
        $region23: #{tpu_custom_call.1} parent=11 // pred_region
          _
        $region24: #{tpu_custom_call.1} parent=11 // pred_fallthru
          _
        // Predicated region
        $region25: #{tpu_custom_call.1} parent=11 // pred_check
          %p234 = pneg %p140
        $region26: #{tpu_custom_call.1} parent=11 // pred_check_branch
          %236 = sbr.rel (%p234) target = $region28
        $region27: #{tpu_custom_call.1} parent=11 // pred_region
          _
        $region28: #{tpu_custom_call.1} parent=11 // pred_fallthru
          _
        // Predicated region
        $region29: #{tpu_custom_call.1} parent=11 // pred_check
          %p237 = pneg %p161
        $region30: #{tpu_custom_call.1} parent=11 // pred_check_branch
          %239 = sbr.rel (%p237) target = $region32
        $region31: #{tpu_custom_call.1} parent=11 // pred_region
          %s241 = ssub.s32 1024, 1024
          %242 = vsyncadd [#allocation5], %s241
          %s243 = sshll.u32 [#allocation4], 4
          %s244 = int_to_ptr.vmem [resolvable:$true] %s243
          %249 = dma.hbm_to_vmem [thread:$0]  %s6, 1024, %s244, [#allocation5], 64, 64, 4
        $region32: #{tpu_custom_call.1} parent=11 // pred_fallthru
          _
        // Predicated region
        $region33: #{tpu_custom_call.1} parent=11 // pred_check
          %p250 = pneg %p182
        $region34: #{tpu_custom_call.1} parent=11 // pred_check_branch
          %252 = sbr.rel (%p250) target = $region36
        $region35: #{tpu_custom_call.1} parent=11 // pred_region
          _
        $region36: #{tpu_custom_call.1} parent=11 // pred_fallthru
          _
      $region12: #{tpu_custom_call.1} parent=5 // pred_fallthru
        _
      %p253 = scmp.lt.s32.totalorder %s18, 4
      // Predicated region
      $region37: #{tpu_custom_call.1} parent=5 // pred_check
        %p254 = pneg %p253
      $region38: #{tpu_custom_call.1} parent=5 // pred_check_branch
        %256 = sbr.rel (%p254) target = $region40
      $region39: #{tpu_custom_call.1} parent=5 // pred_region
        // Predicated region
        $region41: #{tpu_custom_call.1} parent=39 // pred_check
          %p257 = pneg %p50
        $region42: #{tpu_custom_call.1} parent=39 // pred_check_branch
          %259 = sbr.rel (%p257) target = $region44
        $region43: #{tpu_custom_call.1} parent=39 // pred_region
          %p260 = scmp.lt.s32.totalorder %s26, 1
          %s261 = scalar_select %p260, %s26, 1
          %s262 = smul.addr %s261, 40
          %s263 = smul.addr %s262, 8
          %s264 = scalar_lea.vmem %s1, %s263
        $region44: #{tpu_custom_call.1} parent=39 // pred_fallthru
          _
      $region40: #{tpu_custom_call.1} parent=5 // pred_fallthru
        _
      %p265 = scmp.le.s32.totalorder 1, %s18
      %p266 = scmp.lt.s32.totalorder %s18, 5
      %p267 = pnand %p265, %p266
      %p268 = pneg %p267
      // Predicated region
      $region45: #{tpu_custom_call.1} parent=5 // pred_check
        _
      $region46: #{tpu_custom_call.1} parent=5 // pred_check_branch
        %270 = sbr.rel (%p267) target = $region48
      $region47: #{tpu_custom_call.1} parent=5 // pred_region
        %s271 = ssub.s32 %s18, 1
        // Predicated region
        $region49: #{tpu_custom_call.1} parent=47 // pred_check
          %p272 = pneg %p161
        $region50: #{tpu_custom_call.1} parent=47 // pred_check_branch
          %274 = sbr.rel (%p272) target = $region52
        $region51: #{tpu_custom_call.1} parent=47 // pred_region
          %275 = dma.done [#allocation5], 1024
        $region52: #{tpu_custom_call.1} parent=47 // pred_fallthru
          _
        %p276 = scmp.lt.s32.totalorder %s28, 1
        %s277 = scalar_select %p276, %s28, 1
        %s278 = smul.addr %s277, 40
        %s279 = smul.addr %s278, 8
        %s280 = scalar_lea.vmem %s1, %s279
        %p281 = pneg %p56
        %p282 = pneg %p53
        %p283 = pneg %p77
        %p284 = pneg %p74
        %p285 = pneg %p98
        %p286 = pneg %p95
        %p287 = pneg %p119
        %p288 = pneg %p116
        %p289 = pneg %p140
        %p290 = pneg %p137
        %p291 = pneg %p161
        %p292 = pneg %p158
        %p293 = pneg %p182
        %p294 = pneg %p179
        %p295 = pneg %p210
        %p296 = pneg %p207
        %s297 = sand.u32 %s197, 1
        %s298 = scalar_lea.sflag [#allocation6], %s297
        %s299 = sand.u32 %s197, 1
        %s300 = smul.addr %s299, 128
        %s301 = scalar_lea.vmem [#allocation7], %s300
        %p302 = scmp.lt.s32.totalorder %s28, 1
        %s303 = scalar_select %p302, %s28, 1
        %s304 = smul.addr %s303, 40
        %s305 = smul.addr %s304, 8
        %s306 = scalar_lea.vmem %s1, %s305
        %s307 = smul.u32 8, %s28
        %p309 = scmp.lt.s32.totalorder %s28, 0
        %s310 = ssub.s32 0, %s28
        %s311 = scalar_select %p309, %s310, %s28
        %s312 = sand.u32 %s311, 1
        %s313 = ssub.s32 0, %s312
        %s314 = scalar_select %p309, %s313, %s312
        %p315 = scmp.ne.s32.totalorder %s314, 0
        %p316 = scmp.lt.s32.totalorder %s314, 0
        %p317 = pnand %p316, %p315
        %p318 = pneg %p317
        %s319 = sadd.s32 %s314, 2
        %s320 = scalar_select %p318, %s319, %s314
        %p321 = scmp.eq.s32.totalorder %s28, 0
        // Predicated region
        $region53: #{tpu_custom_call.1} parent=47 // pred_check
          %p322 = pneg %p321
        $region54: #{tpu_custom_call.1} parent=47 // pred_check_branch
          %324 = sbr.rel (%p322) target = $region56
        $region55: #{tpu_custom_call.1} parent=47 // pred_region
          %s325 = smul.u32 %s28, 8
          %s326 = smul.u32 %s325, 4
          %s327 = smul.u32 %s27, 72
          %s328 = sadd.s32 %s326, %s327
          %s329 = smul.addr %s328, 4
          %s330 = scalar_lea.vmem %s0, %s329
          %s331 = smul.u32 %s320, 40
          %s332 = smul.addr %s331, 4
          %s333 = scalar_lea.vmem [#allocation2], %s332
          %s334 = scalar_lea.sflag [#allocation3], %s320
          %p336 = scmp.lt.u32.totalorder 160, 8
          %p337 = pneg %p336
          // Predicated region
          $region57: #{tpu_custom_call.1} parent=55 // pred_check
            _
          $region58: #{tpu_custom_call.1} parent=55 // pred_check_branch
            %339 = sbr.rel (%p336) target = $region60
          $region59: #{tpu_custom_call.1} parent=55 // pred_region
            %s355 = sand.u32 160, 7
            %p356 = scmp.eq.s32.totalorder %s355, 0
            // Predicated region
            $region72: #{tpu_custom_call.1} parent=59 // pred_check
              %p357 = pneg %p356
            $region73: #{tpu_custom_call.1} parent=59 // pred_check_branch
              %359 = sbr.rel (%p357) target = $region75
            $region74: #{tpu_custom_call.1} parent=59 // pred_region
              loop: start=0, step=1, limit=1
              $region76: #{tpu_custom_call.1} parent=74 // loop_pre_header
                _
              $region77: #{tpu_custom_call.1} parent=74 // loop_header
                %s361 = sphi 0, %s365
                %p362 = scmp.ge.s32.totalorder %s361, 1
                %s366 = sphi %s330, %s330
                %s367 = sphi %s333, %s333
              $region78: #{tpu_custom_call.1} parent=74 // loop_header_branch
                %364 = sbr.rel (%p362) target = $region82
              $region79: #{tpu_custom_call.1} parent=74 // loop_body
                %v368 = vld [vmem:[%s366] sm:$0xff]
                %369 = vst [vmem:[%s367] sm:$0xff] %v368
                %v370 = vld [vmem:[%s366 + $0x8] sm:$0xff]
                %371 = vst [vmem:[%s367 + $0x8] sm:$0xff] %v370
                %v372 = vld [vmem:[%s366 + $0x10] sm:$0xff]
                %373 = vst [vmem:[%s367 + $0x10] sm:$0xff] %v372
                %v374 = vld [vmem:[%s366 + $0x18] sm:$0xff]
                %375 = vst [vmem:[%s367 + $0x18] sm:$0xff] %v374
                %v376 = vld [vmem:[%s366 + $0x20] sm:$0xff]
                %377 = vst [vmem:[%s367 + $0x20] sm:$0xff] %v376
                %v378 = vld [vmem:[%s366 + $0x28] sm:$0xff]
                %379 = vst [vmem:[%s367 + $0x28] sm:$0xff] %v378
                %v380 = vld [vmem:[%s366 + $0x30] sm:$0xff]
                %381 = vst [vmem:[%s367 + $0x30] sm:$0xff] %v380
                %v382 = vld [vmem:[%s366 + $0x38] sm:$0xff]
                %383 = vst [vmem:[%s367 + $0x38] sm:$0xff] %v382
                %v384 = vld [vmem:[%s366 + $0x40] sm:$0xff]
                %385 = vst [vmem:[%s367 + $0x40] sm:$0xff] %v384
                %v386 = vld [vmem:[%s366 + $0x48] sm:$0xff]
                %387 = vst [vmem:[%s367 + $0x48] sm:$0xff] %v386
                %v388 = vld [vmem:[%s366 + $0x50] sm:$0xff]
                %389 = vst [vmem:[%s367 + $0x50] sm:$0xff] %v388
                %v390 = vld [vmem:[%s366 + $0x58] sm:$0xff]
                %391 = vst [vmem:[%s367 + $0x58] sm:$0xff] %v390
                %v392 = vld [vmem:[%s366 + $0x60] sm:$0xff]
                %393 = vst [vmem:[%s367 + $0x60] sm:$0xff] %v392
                %v394 = vld [vmem:[%s366 + $0x68] sm:$0xff]
                %395 = vst [vmem:[%s367 + $0x68] sm:$0xff] %v394
                %v396 = vld [vmem:[%s366 + $0x70] sm:$0xff]
                %397 = vst [vmem:[%s367 + $0x70] sm:$0xff] %v396
                %v398 = vld [vmem:[%s366 + $0x78] sm:$0xff]
                %399 = vst [vmem:[%s367 + $0x78] sm:$0xff] %v398
                %v400 = vld [vmem:[%s366 + $0x80] sm:$0xff]
                %401 = vst [vmem:[%s367 + $0x80] sm:$0xff] %v400
                %v402 = vld [vmem:[%s366 + $0x88] sm:$0xff]
                %403 = vst [vmem:[%s367 + $0x88] sm:$0xff] %v402
                %v404 = vld [vmem:[%s366 + $0x90] sm:$0xff]
                %405 = vst [vmem:[%s367 + $0x90] sm:$0xff] %v404
                %v406 = vld [vmem:[%s366 + $0x98] sm:$0xff]
                %407 = vst [vmem:[%s367 + $0x98] sm:$0xff] %v406
              $region80: #{tpu_custom_call.1} parent=74 // loop_footer
                %s365 = sadd.s32 1, %s361
              $region81: #{tpu_custom_call.1} parent=74 // loop_footer_branch
                %360 = sbr.rel target = $region77
              $region82: #{tpu_custom_call.1} parent=74 // loop_exit
                _
            $region75: #{tpu_custom_call.1} parent=59 // pred_fallthru
              _
            %p408 = pneg %p356
            // Predicated region
            $region83: #{tpu_custom_call.1} parent=59 // pred_check
              _
            $region84: #{tpu_custom_call.1} parent=59 // pred_check_branch
              %410 = sbr.rel (%p356) target = $region86
            $region85: #{tpu_custom_call.1} parent=59 // pred_region
              %s411 = sand.u32 160, 7
            $region86: #{tpu_custom_call.1} parent=59 // pred_fallthru
              _
          $region60: #{tpu_custom_call.1} parent=55 // pred_fallthru
            _
          // Predicated region
          $region61: #{tpu_custom_call.1} parent=55 // pred_check
            %p340 = pneg %p336
          $region62: #{tpu_custom_call.1} parent=55 // pred_check_branch
            %342 = sbr.rel (%p340) target = $region64
          $region63: #{tpu_custom_call.1} parent=55 // pred_region
            %s343 = sshll.u32 1, 160
            %s344 = ssub.s32 %s343, 1
            loop: start=0, step=1, limit=1
            $region65: #{tpu_custom_call.1} parent=63 // loop_pre_header
              _
            $region66: #{tpu_custom_call.1} parent=63 // loop_header
              %s346 = sphi 0, %s350
              %p347 = scmp.ge.s32.totalorder %s346, 1
              %s351 = sphi %s330, %s330
              %s352 = sphi %s333, %s333
            $region67: #{tpu_custom_call.1} parent=63 // loop_header_branch
              %349 = sbr.rel (%p347) target = $region71
            $region68: #{tpu_custom_call.1} parent=63 // loop_body
              %v353 = vld [vmem:[%s351] sm:%s344]
              %354 = vst [vmem:[%s352] sm:%s344] %v353
            $region69: #{tpu_custom_call.1} parent=63 // loop_footer
              %s350 = sadd.s32 1, %s346
            $region70: #{tpu_custom_call.1} parent=63 // loop_footer_branch
              %345 = sbr.rel target = $region66
            $region71: #{tpu_custom_call.1} parent=63 // loop_exit
              _
          $region64: #{tpu_custom_call.1} parent=55 // pred_fallthru
            _
          // Predicated region
          $region87: #{tpu_custom_call.1} parent=55 // pred_check
            _
          $region88: #{tpu_custom_call.1} parent=55 // pred_check_branch
            %414 = sbr.rel (0) target = $region90
          $region89: #{tpu_custom_call.1} parent=55 // pred_region
            %415 = vsyncadd %s334, 2560
          $region90: #{tpu_custom_call.1} parent=55 // pred_fallthru
            _
        $region56: #{tpu_custom_call.1} parent=47 // pred_fallthru
          _
        %s416 = smul.u32 %s320, 40
        %s417 = smul.addr %s416, 4
        %s418 = scalar_lea.vmem [#allocation2], %s417
        %s419 = scalar_lea.sflag [#allocation3], %s320
        %s420 = smul.u32 4, 10
        %s421 = smul.u32 %s420, 4
        %s422 = smul.u32 %s421, 1
        %s423 = sshll.u32 %s422, 4
        %424 = dma.done %s419, %s423
        %s425 = sadd.s32 %s28, 1
        %p426 = scmp.lt.s32.totalorder %s425, 2
        // Predicated region
        $region91: #{tpu_custom_call.1} parent=47 // pred_check
          %p427 = pneg %p426
        $region92: #{tpu_custom_call.1} parent=47 // pred_check_branch
          %429 = sbr.rel (%p427) target = $region94
        $region93: #{tpu_custom_call.1} parent=47 // pred_region
          %s430 = ssub.s32 1, %s320
          %s431 = smul.u32 %s425, 8
          %s432 = smul.u32 %s431, 4
          %s433 = smul.u32 %s27, 72
          %s434 = sadd.s32 %s432, %s433
          %s435 = smul.addr %s434, 4
          %s436 = scalar_lea.vmem %s0, %s435
          %s437 = smul.u32 %s430, 40
          %s438 = smul.addr %s437, 4
          %s439 = scalar_lea.vmem [#allocation2], %s438
          %s440 = scalar_lea.sflag [#allocation3], %s430
          %p442 = scmp.lt.u32.totalorder 160, 8
          %p443 = pneg %p442
          // Predicated region
          $region95: #{tpu_custom_call.1} parent=93 // pred_check
            _
          $region96: #{tpu_custom_call.1} parent=93 // pred_check_branch
            %445 = sbr.rel (%p442) target = $region98
          $region97: #{tpu_custom_call.1} parent=93 // pred_region
            %s461 = sand.u32 160, 7
            %p462 = scmp.eq.s32.totalorder %s461, 0
            // Predicated region
            $region110: #{tpu_custom_call.1} parent=97 // pred_check
              %p463 = pneg %p462
            $region111: #{tpu_custom_call.1} parent=97 // pred_check_branch
              %465 = sbr.rel (%p463) target = $region113
            $region112: #{tpu_custom_call.1} parent=97 // pred_region
              loop: start=0, step=1, limit=1
              $region114: #{tpu_custom_call.1} parent=112 // loop_pre_header
                _
              $region115: #{tpu_custom_call.1} parent=112 // loop_header
                %s467 = sphi 0, %s471
                %p468 = scmp.ge.s32.totalorder %s467, 1
                %s472 = sphi %s436, %s436
                %s473 = sphi %s439, %s439
              $region116: #{tpu_custom_call.1} parent=112 // loop_header_branch
                %470 = sbr.rel (%p468) target = $region120
              $region117: #{tpu_custom_call.1} parent=112 // loop_body
                %v474 = vld [vmem:[%s472] sm:$0xff]
                %475 = vst [vmem:[%s473] sm:$0xff] %v474
                %v476 = vld [vmem:[%s472 + $0x8] sm:$0xff]
                %477 = vst [vmem:[%s473 + $0x8] sm:$0xff] %v476
                %v478 = vld [vmem:[%s472 + $0x10] sm:$0xff]
                %479 = vst [vmem:[%s473 + $0x10] sm:$0xff] %v478
                %v480 = vld [vmem:[%s472 + $0x18] sm:$0xff]
                %481 = vst [vmem:[%s473 + $0x18] sm:$0xff] %v480
                %v482 = vld [vmem:[%s472 + $0x20] sm:$0xff]
                %483 = vst [vmem:[%s473 + $0x20] sm:$0xff] %v482
                %v484 = vld [vmem:[%s472 + $0x28] sm:$0xff]
                %485 = vst [vmem:[%s473 + $0x28] sm:$0xff] %v484
                %v486 = vld [vmem:[%s472 + $0x30] sm:$0xff]
                %487 = vst [vmem:[%s473 + $0x30] sm:$0xff] %v486
                %v488 = vld [vmem:[%s472 + $0x38] sm:$0xff]
                %489 = vst [vmem:[%s473 + $0x38] sm:$0xff] %v488
                %v490 = vld [vmem:[%s472 + $0x40] sm:$0xff]
                %491 = vst [vmem:[%s473 + $0x40] sm:$0xff] %v490
                %v492 = vld [vmem:[%s472 + $0x48] sm:$0xff]
                %493 = vst [vmem:[%s473 + $0x48] sm:$0xff] %v492
                %v494 = vld [vmem:[%s472 + $0x50] sm:$0xff]
                %495 = vst [vmem:[%s473 + $0x50] sm:$0xff] %v494
                %v496 = vld [vmem:[%s472 + $0x58] sm:$0xff]
                %497 = vst [vmem:[%s473 + $0x58] sm:$0xff] %v496
                %v498 = vld [vmem:[%s472 + $0x60] sm:$0xff]
                %499 = vst [vmem:[%s473 + $0x60] sm:$0xff] %v498
                %v500 = vld [vmem:[%s472 + $0x68] sm:$0xff]
                %501 = vst [vmem:[%s473 + $0x68] sm:$0xff] %v500
                %v502 = vld [vmem:[%s472 + $0x70] sm:$0xff]
                %503 = vst [vmem:[%s473 + $0x70] sm:$0xff] %v502
                %v504 = vld [vmem:[%s472 + $0x78] sm:$0xff]
                %505 = vst [vmem:[%s473 + $0x78] sm:$0xff] %v504
                %v506 = vld [vmem:[%s472 + $0x80] sm:$0xff]
                %507 = vst [vmem:[%s473 + $0x80] sm:$0xff] %v506
                %v508 = vld [vmem:[%s472 + $0x88] sm:$0xff]
                %509 = vst [vmem:[%s473 + $0x88] sm:$0xff] %v508
                %v510 = vld [vmem:[%s472 + $0x90] sm:$0xff]
                %511 = vst [vmem:[%s473 + $0x90] sm:$0xff] %v510
                %v512 = vld [vmem:[%s472 + $0x98] sm:$0xff]
                %513 = vst [vmem:[%s473 + $0x98] sm:$0xff] %v512
              $region118: #{tpu_custom_call.1} parent=112 // loop_footer
                %s471 = sadd.s32 1, %s467
              $region119: #{tpu_custom_call.1} parent=112 // loop_footer_branch
                %466 = sbr.rel target = $region115
              $region120: #{tpu_custom_call.1} parent=112 // loop_exit
                _
            $region113: #{tpu_custom_call.1} parent=97 // pred_fallthru
              _
            %p514 = pneg %p462
            // Predicated region
            $region121: #{tpu_custom_call.1} parent=97 // pred_check
              _
            $region122: #{tpu_custom_call.1} parent=97 // pred_check_branch
              %516 = sbr.rel (%p462) target = $region124
            $region123: #{tpu_custom_call.1} parent=97 // pred_region
              %s517 = sand.u32 160, 7
            $region124: #{tpu_custom_call.1} parent=97 // pred_fallthru
              _
          $region98: #{tpu_custom_call.1} parent=93 // pred_fallthru
            _
          // Predicated region
          $region99: #{tpu_custom_call.1} parent=93 // pred_check
            %p446 = pneg %p442
          $region100: #{tpu_custom_call.1} parent=93 // pred_check_branch
            %448 = sbr.rel (%p446) target = $region102
          $region101: #{tpu_custom_call.1} parent=93 // pred_region
            %s449 = sshll.u32 1, 160
            %s450 = ssub.s32 %s449, 1
            loop: start=0, step=1, limit=1
            $region103: #{tpu_custom_call.1} parent=101 // loop_pre_header
              _
            $region104: #{tpu_custom_call.1} parent=101 // loop_header
              %s452 = sphi 0, %s456
              %p453 = scmp.ge.s32.totalorder %s452, 1
              %s457 = sphi %s436, %s436
              %s458 = sphi %s439, %s439
            $region105: #{tpu_custom_call.1} parent=101 // loop_header_branch
              %455 = sbr.rel (%p453) target = $region109
            $region106: #{tpu_custom_call.1} parent=101 // loop_body
              %v459 = vld [vmem:[%s457] sm:%s450]
              %460 = vst [vmem:[%s458] sm:%s450] %v459
            $region107: #{tpu_custom_call.1} parent=101 // loop_footer
              %s456 = sadd.s32 1, %s452
            $region108: #{tpu_custom_call.1} parent=101 // loop_footer_branch
              %451 = sbr.rel target = $region104
            $region109: #{tpu_custom_call.1} parent=101 // loop_exit
              _
          $region102: #{tpu_custom_call.1} parent=93 // pred_fallthru
            _
          // Predicated region
          $region125: #{tpu_custom_call.1} parent=93 // pred_check
            _
          $region126: #{tpu_custom_call.1} parent=93 // pred_check_branch
            %520 = sbr.rel (0) target = $region128
          $region127: #{tpu_custom_call.1} parent=93 // pred_region
            %521 = vsyncadd %s440, 2560
          $region128: #{tpu_custom_call.1} parent=93 // pred_fallthru
            _
        $region94: #{tpu_custom_call.1} parent=47 // pred_fallthru
          _
        %v522 = vld [vmem:[%s418] sm:$0xf]
        %v523 = vld [vmem:[%s418 + $0x4] sm:$0xf]
        %v524 = vld [vmem:[%s418 + $0x8] sm:$0xf]
        %v525 = vld [vmem:[%s418 + $0xc] sm:$0xf]
        %v526 = vld [vmem:[%s418 + $0x10] sm:$0xf]
        %v527 = vld [vmem:[%s418 + $0x14] sm:$0xf]
        %v528 = vld [vmem:[%s418 + $0x18] sm:$0xf]
        %v529 = vld [vmem:[%s418 + $0x1c] sm:$0xf]
        %v530 = vld [vmem:[%s418 + $0x20] sm:$0xf]
        %v531 = vld [vmem:[%s418 + $0x24] sm:$0xf]
        %v532 = vld [vmem:[%s418 + $0x28] sm:$0xf]
        %v533 = vld [vmem:[%s418 + $0x2c] sm:$0xf]
        %v534 = vld [vmem:[%s418 + $0x30] sm:$0xf]
        %v535 = vld [vmem:[%s418 + $0x34] sm:$0xf]
        %v536 = vld [vmem:[%s418 + $0x38] sm:$0xf]
        %v537 = vld [vmem:[%s418 + $0x3c] sm:$0xf]
        %v538 = vld [vmem:[%s418 + $0x40] sm:$0xf]
        %v539 = vld [vmem:[%s418 + $0x44] sm:$0xf]
        %v540 = vld [vmem:[%s418 + $0x48] sm:$0xf]
        %v541 = vld [vmem:[%s418 + $0x4c] sm:$0xf]
        %v542 = vld [vmem:[%s418 + $0x50] sm:$0xf]
        %v543 = vld [vmem:[%s418 + $0x54] sm:$0xf]
        %v544 = vld [vmem:[%s418 + $0x58] sm:$0xf]
        %v545 = vld [vmem:[%s418 + $0x5c] sm:$0xf]
        %v546 = vld [vmem:[%s418 + $0x60] sm:$0xf]
        %v547 = vld [vmem:[%s418 + $0x64] sm:$0xf]
        %v548 = vld [vmem:[%s418 + $0x68] sm:$0xf]
        %v549 = vld [vmem:[%s418 + $0x6c] sm:$0xf]
        %v550 = vld [vmem:[%s418 + $0x70] sm:$0xf]
        %v551 = vld [vmem:[%s418 + $0x74] sm:$0xf]
        %v552 = vld [vmem:[%s418 + $0x78] sm:$0xf]
        %v553 = vld [vmem:[%s418 + $0x7c] sm:$0xf]
        %v554 = vld [vmem:[%s418 + $0x80] sm:$0xf]
        %v555 = vld [vmem:[%s418 + $0x84] sm:$0xf]
        %v556 = vld [vmem:[%s418 + $0x88] sm:$0xf]
        %v557 = vld [vmem:[%s418 + $0x8c] sm:$0xf]
        %v558 = vld [vmem:[%s418 + $0x90] sm:$0xf]
        %v559 = vld [vmem:[%s418 + $0x94] sm:$0xf]
        %v560 = vld [vmem:[%s418 + $0x98] sm:$0xf]
        %v561 = vld [vmem:[%s418 + $0x9c] sm:$0xf]
        %v562 = vld [vmem:[%s2] sm:$0xf]
        %v563 = vld [vmem:[%s2 + $0x4] sm:$0xf]
        %v564 = vld [vmem:[%s2 + $0x8] sm:$0xf]
        %v565 = vld [vmem:[%s2 + $0xc] sm:$0xf]
        %v566 = vld [vmem:[%s2 + $0x10] sm:$0xf]
        %v567 = vld [vmem:[%s2 + $0x14] sm:$0xf]
        %v568 = vld [vmem:[%s2 + $0x18] sm:$0xf]
        %v569 = vld [vmem:[%s2 + $0x1c] sm:$0xf]
        %v570 = vld [vmem:[%s2 + $0x20] sm:$0xf]
        %v571 = vld [vmem:[%s2 + $0x24] sm:$0xf]
        %v572 = vld [vmem:[%s2 + $0x28] sm:$0xf]
        %v573 = vld [vmem:[%s2 + $0x2c] sm:$0xf]
        %v574 = vld [vmem:[%s2 + $0x30] sm:$0xf]
        %v575 = vld [vmem:[%s2 + $0x34] sm:$0xf]
        %v576 = vld [vmem:[%s2 + $0x38] sm:$0xf]
        %v577 = vld [vmem:[%s2 + $0x3c] sm:$0xf]
        %v578 = vld [vmem:[%s3] sm:$0x1]
        %v580 = vlaneseq
        %v581 = vshrl.u32 %v580, 7
        %v582 = vsub.s32 0, %v581
        %v583 = vrot.slane %v578, %v582
        %v625 = vunpack.c.l.b16 %v522
        %v626 = vunpack.c.l.b16 %v523
        %v627 = vunpack.c.l.b16 %v524
        %v628 = vunpack.c.l.b16 %v525
        %v629 = vunpack.c.l.b16 %v526
        %v630 = vunpack.c.l.b16 %v527
        %v631 = vunpack.c.l.b16 %v528
        %v632 = vunpack.c.l.b16 %v529
        %v633 = vunpack.c.l.b16 %v530
        %v634 = vunpack.c.l.b16 %v531
        %v635 = vunpack.c.l.b16 %v532
        %v636 = vunpack.c.l.b16 %v533
        %v637 = vunpack.c.l.b16 %v534
        %v638 = vunpack.c.l.b16 %v535
        %v639 = vunpack.c.l.b16 %v536
        %v640 = vunpack.c.l.b16 %v537
        %v641 = vunpack.c.l.b16 %v538
        %v642 = vunpack.c.l.b16 %v539
        %v643 = vunpack.c.l.b16 %v540
        %v644 = vunpack.c.l.b16 %v541
        %v645 = vunpack.c.l.b16 %v542
        %v646 = vunpack.c.l.b16 %v543
        %v647 = vunpack.c.l.b16 %v544
        %v648 = vunpack.c.l.b16 %v545
        %v649 = vunpack.c.l.b16 %v546
        %v650 = vunpack.c.l.b16 %v547
        %v651 = vunpack.c.l.b16 %v548
        %v652 = vunpack.c.l.b16 %v549
        %v653 = vunpack.c.l.b16 %v550
        %v654 = vunpack.c.l.b16 %v551
        %v655 = vunpack.c.l.b16 %v552
        %v656 = vunpack.c.l.b16 %v553
        %v657 = vunpack.c.l.b16 %v554
        %v658 = vunpack.c.l.b16 %v555
        %v659 = vunpack.c.l.b16 %v556
        %v660 = vunpack.c.l.b16 %v557
        %v661 = vunpack.c.l.b16 %v558
        %v662 = vunpack.c.l.b16 %v559
        %v663 = vunpack.c.l.b16 %v560
        %v664 = vunpack.c.l.b16 %v561
        %v665 = vpack.c.b16 %v626, %v625
        %v666 = vpack.c.b16 %v628, %v627
        %v667 = vpack.c.b16 %v630, %v629
        %v668 = vpack.c.b16 %v632, %v631
        %v669 = vpack.c.b16 %v634, %v633
        %v670 = vpack.c.b16 %v636, %v635
        %v671 = vpack.c.b16 %v638, %v637
        %v672 = vpack.c.b16 %v640, %v639
        %v673 = vpack.c.b16 %v642, %v641
        %v674 = vpack.c.b16 %v644, %v643
        %v675 = vpack.c.b16 %v646, %v645
        %v676 = vpack.c.b16 %v648, %v647
        %v677 = vpack.c.b16 %v650, %v649
        %v678 = vpack.c.b16 %v652, %v651
        %v679 = vpack.c.b16 %v654, %v653
        %v680 = vpack.c.b16 %v656, %v655
        %v681 = vpack.c.b16 %v658, %v657
        %v682 = vpack.c.b16 %v660, %v659
        %v683 = vpack.c.b16 %v662, %v661
        %v684 = vpack.c.b16 %v664, %v663
        %v721 = vunpack.c.l.b16 %v562
        %v722 = vunpack.c.l.b16 %v563
        %v723 = vunpack.c.l.b16 %v564
        %v724 = vunpack.c.l.b16 %v565
        %v725 = vunpack.c.l.b16 %v566
        %v726 = vunpack.c.l.b16 %v567
        %v727 = vunpack.c.l.b16 %v568
        %v728 = vunpack.c.l.b16 %v569
        %v729 = vunpack.c.l.b16 %v570
        %v730 = vunpack.c.l.b16 %v571
        %v731 = vunpack.c.l.b16 %v572
        %v732 = vunpack.c.l.b16 %v573
        %v733 = vunpack.c.l.b16 %v574
        %v734 = vunpack.c.l.b16 %v575
        %v735 = vunpack.c.l.b16 %v576
        %v736 = vunpack.c.l.b16 %v577
        %v737 = vpack.c.b16 %v722, %v721
        %v738 = vpack.c.b16 %v724, %v723
        %v739 = vpack.c.b16 %v726, %v725
        %v740 = vpack.c.b16 %v728, %v727
        %v741 = vpack.c.b16 %v730, %v729
        %v742 = vpack.c.b16 %v732, %v731
        %v743 = vpack.c.b16 %v734, %v733
        %v744 = vpack.c.b16 %v736, %v735
        %753 = vmatprep.subr.bf16.mxu0 0
        %754 = vmatpush1.bf16.msra.mxu0 %v744
        %755 = vmatprep.subr.bf16.mxu0 0
        %756 = vmatpush1.bf16.msra.mxu0 %v743
        %757 = vmatprep.subr.bf16.mxu0 0
        %758 = vmatpush1.bf16.msra.mxu0 %v742
        %759 = vmatprep.subr.bf16.mxu0 0
        %760 = vmatpush1.bf16.msra.mxu0 %v741
        %761 = vmatprep.subr.bf16.mxu0 0
        %762 = vmatpush1.bf16.msra.mxu0 %v740
        %763 = vmatprep.subr.bf16.mxu0 0
        %764 = vmatpush1.bf16.msra.mxu0 %v739
        %765 = vmatprep.subr.bf16.mxu0 0
        %766 = vmatpush1.bf16.msra.mxu0 %v738
        %767 = vmatprep.subr.bf16.mxu0 0
        %768 = vmatpush1.bf16.msra.mxu0 %v737
        %769 = vmatprep.subr.bf16.mxu0 0
        %770 = vmatpush2.bf16.msra.mxu0 0
        %771 = vmatprep.subr.bf16.mxu0 0
        %772 = vmatpush2.bf16.msra.mxu0 0
        %773 = vmatprep.subr.bf16.mxu0 0
        %774 = vmatpush2.bf16.msra.mxu0 0
        %775 = vmatprep.subr.bf16.mxu0 0
        %776 = vmatpush2.bf16.msra.mxu0 0
        %777 = vmatprep.subr.bf16.mxu0 0
        %778 = vmatpush2.bf16.msra.mxu0 0
        %779 = vmatprep.subr.bf16.mxu0 0
        %780 = vmatpush2.bf16.msra.mxu0 0
        %781 = vmatprep.subr.bf16.mxu0 0
        %782 = vmatpush2.bf16.msra.mxu0 0
        %783 = vmatprep.subr.bf16.mxu0 0
        %784 = vmatpush2.bf16.msra.mxu0 0
        %785 = vmatprep.mubr.bf16.mxu0 0
        %786 = vmatmul.mubr.bf16.gmra.mxu0 %v665
        %v787 = vpop.f32.mrf.mxu0
        %v788 = vadd.f32 %v583, %v787
        %v789 = vpop.f32.mrf.mxu0
        %v790 = vpop.f32.mrf.mxu0
        %v791 = vadd.f32 %v583, %v790
        %v792 = vpop.f32.mrf.mxu0
        %793 = vmatprep.mubr.bf16.mxu0 0
        %794 = vmatmul.mubr.bf16.gmra.mxu0 %v666
        %v795 = vpop.f32.mrf.mxu0
        %v796 = vadd.f32 %v583, %v795
        %v797 = vpop.f32.mrf.mxu0
        %v798 = vpop.f32.mrf.mxu0
        %v799 = vpop.f32.mrf.mxu0
        %800 = vmatprep.mubr.bf16.mxu0 0
        %801 = vmatmul.mubr.bf16.gmra.mxu0 %v667
        %v802 = vpop.f32.mrf.mxu0
        %v803 = vadd.f32 %v583, %v802
        %v804 = vpop.f32.mrf.mxu0
        %v805 = vpop.f32.mrf.mxu0
        %v806 = vadd.f32 %v583, %v805
        %v807 = vpop.f32.mrf.mxu0
        %808 = vmatprep.mubr.bf16.mxu0 0
        %809 = vmatmul.mubr.bf16.gmra.mxu0 %v668
        %v810 = vpop.f32.mrf.mxu0
        %v811 = vadd.f32 %v583, %v810
        %v812 = vpop.f32.mrf.mxu0
        %v813 = vpop.f32.mrf.mxu0
        %v814 = vpop.f32.mrf.mxu0
        %815 = vmatprep.mubr.bf16.mxu0 0
        %816 = vmatmul.mubr.bf16.gmra.mxu0 %v669
        %v817 = vpop.f32.mrf.mxu0
        %v818 = vadd.f32 %v583, %v817
        %v819 = vpop.f32.mrf.mxu0
        %v820 = vpop.f32.mrf.mxu0
        %v821 = vadd.f32 %v583, %v820
        %v822 = vpop.f32.mrf.mxu0
        %823 = vmatprep.mubr.bf16.mxu0 0
        %824 = vmatmul.mubr.bf16.gmra.mxu0 %v670
        %v825 = vpop.f32.mrf.mxu0
        %v826 = vadd.f32 %v583, %v825
        %v827 = vpop.f32.mrf.mxu0
        %v828 = vpop.f32.mrf.mxu0
        %v829 = vpop.f32.mrf.mxu0
        %830 = vmatprep.mubr.bf16.mxu0 0
        %831 = vmatmul.mubr.bf16.gmra.mxu0 %v671
        %v832 = vpop.f32.mrf.mxu0
        %v833 = vadd.f32 %v583, %v832
        %v834 = vpop.f32.mrf.mxu0
        %v835 = vpop.f32.mrf.mxu0
        %v836 = vadd.f32 %v583, %v835
        %v837 = vpop.f32.mrf.mxu0
        %838 = vmatprep.mubr.bf16.mxu0 0
        %839 = vmatmul.mubr.bf16.gmra.mxu0 %v672
        %v840 = vpop.f32.mrf.mxu0
        %v841 = vadd.f32 %v583, %v840
        %v842 = vpop.f32.mrf.mxu0
        %v843 = vpop.f32.mrf.mxu0
        %v844 = vpop.f32.mrf.mxu0
        %845 = vmatprep.mubr.bf16.mxu0 0
        %846 = vmatmul.mubr.bf16.gmra.mxu0 %v673
        %v847 = vpop.f32.mrf.mxu0
        %v848 = vadd.f32 %v583, %v847
        %v849 = vpop.f32.mrf.mxu0
        %v850 = vpop.f32.mrf.mxu0
        %v851 = vadd.f32 %v583, %v850
        %v852 = vpop.f32.mrf.mxu0
        %853 = vmatprep.mubr.bf16.mxu0 0
        %854 = vmatmul.mubr.bf16.gmra.mxu0 %v674
        %v855 = vpop.f32.mrf.mxu0
        %v856 = vadd.f32 %v583, %v855
        %v857 = vpop.f32.mrf.mxu0
        %v858 = vpop.f32.mrf.mxu0
        %v859 = vpop.f32.mrf.mxu0
        %860 = vmatprep.mubr.bf16.mxu0 0
        %861 = vmatmul.mubr.bf16.gmra.mxu0 %v675
        %v862 = vpop.f32.mrf.mxu0
        %v863 = vadd.f32 %v583, %v862
        %v864 = vpop.f32.mrf.mxu0
        %v865 = vpop.f32.mrf.mxu0
        %v866 = vadd.f32 %v583, %v865
        %v867 = vpop.f32.mrf.mxu0
        %868 = vmatprep.mubr.bf16.mxu0 0
        %869 = vmatmul.mubr.bf16.gmra.mxu0 %v676
        %v870 = vpop.f32.mrf.mxu0
        %v871 = vadd.f32 %v583, %v870
        %v872 = vpop.f32.mrf.mxu0
        %v873 = vpop.f32.mrf.mxu0
        %v874 = vpop.f32.mrf.mxu0
        %875 = vmatprep.mubr.bf16.mxu0 0
        %876 = vmatmul.mubr.bf16.gmra.mxu0 %v677
        %v877 = vpop.f32.mrf.mxu0
        %v878 = vadd.f32 %v583, %v877
        %v879 = vpop.f32.mrf.mxu0
        %v880 = vpop.f32.mrf.mxu0
        %v881 = vadd.f32 %v583, %v880
        %v882 = vpop.f32.mrf.mxu0
        %883 = vmatprep.mubr.bf16.mxu0 0
        %884 = vmatmul.mubr.bf16.gmra.mxu0 %v678
        %v885 = vpop.f32.mrf.mxu0
        %v886 = vadd.f32 %v583, %v885
        %v887 = vpop.f32.mrf.mxu0
        %v888 = vpop.f32.mrf.mxu0
        %v889 = vpop.f32.mrf.mxu0
        %890 = vmatprep.mubr.bf16.mxu0 0
        %891 = vmatmul.mubr.bf16.gmra.mxu0 %v679
        %v892 = vpop.f32.mrf.mxu0
        %v893 = vadd.f32 %v583, %v892
        %v894 = vpop.f32.mrf.mxu0
        %v895 = vpop.f32.mrf.mxu0
        %v896 = vadd.f32 %v583, %v895
        %v897 = vpop.f32.mrf.mxu0
        %898 = vmatprep.mubr.bf16.mxu0 0
        %899 = vmatmul.mubr.bf16.gmra.mxu0 %v680
        %v900 = vpop.f32.mrf.mxu0
        %v901 = vadd.f32 %v583, %v900
        %v902 = vpop.f32.mrf.mxu0
        %v903 = vpop.f32.mrf.mxu0
        %v904 = vpop.f32.mrf.mxu0
        %905 = vmatprep.mubr.bf16.mxu0 0
        %906 = vmatmul.mubr.bf16.gmra.mxu0 %v681
        %v907 = vpop.f32.mrf.mxu0
        %v908 = vadd.f32 %v583, %v907
        %v909 = vpop.f32.mrf.mxu0
        %v910 = vpop.f32.mrf.mxu0
        %v911 = vadd.f32 %v583, %v910
        %v912 = vpop.f32.mrf.mxu0
        %913 = vmatprep.mubr.bf16.mxu0 0
        %914 = vmatmul.mubr.bf16.gmra.mxu0 %v682
        %v915 = vpop.f32.mrf.mxu0
        %v916 = vadd.f32 %v583, %v915
        %v917 = vpop.f32.mrf.mxu0
        %v918 = vpop.f32.mrf.mxu0
        %v919 = vpop.f32.mrf.mxu0
        %920 = vmatprep.mubr.bf16.mxu0 0
        %921 = vmatmul.mubr.bf16.gmra.mxu0 %v683
        %v922 = vpop.f32.mrf.mxu0
        %v923 = vadd.f32 %v583, %v922
        %v924 = vpop.f32.mrf.mxu0
        %v925 = vpop.f32.mrf.mxu0
        %v926 = vadd.f32 %v583, %v925
        %v927 = vpop.f32.mrf.mxu0
        %928 = vmatprep.mubr.bf16.mxu0 0
        %929 = vmatmul.mubr.bf16.gmra.mxu0 %v684
        %v930 = vpop.f32.mrf.mxu0
        %v931 = vadd.f32 %v583, %v930
        %v932 = vpop.f32.mrf.mxu0
        %v933 = vpop.f32.mrf.mxu0
        %v934 = vpop.f32.mrf.mxu0
        %935 = vdwg.mxu0
        %v936 = vmax.f32 %v788, 0.0
        %v937 = vmax.f32 %v791, 0.0
        %v938 = vmax.f32 %v796, 0.0
        %v939 = vmax.f32 %v803, 0.0
        %v940 = vmax.f32 %v806, 0.0
        %v941 = vmax.f32 %v811, 0.0
        %v942 = vmax.f32 %v818, 0.0
        %v943 = vmax.f32 %v821, 0.0
        %v944 = vmax.f32 %v826, 0.0
        %v945 = vmax.f32 %v833, 0.0
        %v946 = vmax.f32 %v836, 0.0
        %v947 = vmax.f32 %v841, 0.0
        %v948 = vmax.f32 %v848, 0.0
        %v949 = vmax.f32 %v851, 0.0
        %v950 = vmax.f32 %v856, 0.0
        %v951 = vmax.f32 %v863, 0.0
        %v952 = vmax.f32 %v866, 0.0
        %v953 = vmax.f32 %v871, 0.0
        %v954 = vmax.f32 %v878, 0.0
        %v955 = vmax.f32 %v881, 0.0
        %v956 = vmax.f32 %v886, 0.0
        %v957 = vmax.f32 %v893, 0.0
        %v958 = vmax.f32 %v896, 0.0
        %v959 = vmax.f32 %v901, 0.0
        %v960 = vmax.f32 %v908, 0.0
        %v961 = vmax.f32 %v911, 0.0
        %v962 = vmax.f32 %v916, 0.0
        %v963 = vmax.f32 %v923, 0.0
        %v964 = vmax.f32 %v926, 0.0
        %v965 = vmax.f32 %v931, 0.0
        %v966 = vmin.f32 %v936, 6.0
        %v967 = vmin.f32 %v937, 6.0
        %v968 = vmin.f32 %v938, 6.0
        %v969 = vmin.f32 %v939, 6.0
        %v970 = vmin.f32 %v940, 6.0
        %v971 = vmin.f32 %v941, 6.0
        %v972 = vmin.f32 %v942, 6.0
        %v973 = vmin.f32 %v943, 6.0
        %v974 = vmin.f32 %v944, 6.0
        %v975 = vmin.f32 %v945, 6.0
        %v976 = vmin.f32 %v946, 6.0
        %v977 = vmin.f32 %v947, 6.0
        %v978 = vmin.f32 %v948, 6.0
        %v979 = vmin.f32 %v949, 6.0
        %v980 = vmin.f32 %v950, 6.0
        %v981 = vmin.f32 %v951, 6.0
        %v982 = vmin.f32 %v952, 6.0
        %v983 = vmin.f32 %v953, 6.0
        %v984 = vmin.f32 %v954, 6.0
        %v985 = vmin.f32 %v955, 6.0
        %v986 = vmin.f32 %v956, 6.0
        %v987 = vmin.f32 %v957, 6.0
        %v988 = vmin.f32 %v958, 6.0
        %v989 = vmin.f32 %v959, 6.0
        %v990 = vmin.f32 %v960, 6.0
        %v991 = vmin.f32 %v961, 6.0
        %v992 = vmin.f32 %v962, 6.0
        %v993 = vmin.f32 %v963, 6.0
        %v994 = vmin.f32 %v964, 6.0
        %v995 = vmin.f32 %v965, 6.0
        %v996 = vld [vmem:[%s306] sm:$0xff]
        %v997 = vld [vmem:[%s306 + $0x8] sm:$0xff]
        %v998 = vld [vmem:[%s306 + $0x10] sm:$0xff]
        %v999 = vld [vmem:[%s306 + $0x20] sm:$0xff]
        %v1000 = vld [vmem:[%s306 + $0x28] sm:$0xff]
        %v1001 = vld [vmem:[%s306 + $0x30] sm:$0xff]
        %v1002 = vld [vmem:[%s306 + $0x40] sm:$0xff]
        %v1003 = vld [vmem:[%s306 + $0x48] sm:$0xff]
        %v1004 = vld [vmem:[%s306 + $0x50] sm:$0xff]
        %v1005 = vld [vmem:[%s306 + $0x60] sm:$0xff]
        %v1006 = vld [vmem:[%s306 + $0x68] sm:$0xff]
        %v1007 = vld [vmem:[%s306 + $0x70] sm:$0xff]
        %v1008 = vld [vmem:[%s306 + $0x80] sm:$0xff]
        %v1009 = vld [vmem:[%s306 + $0x88] sm:$0xff]
        %v1010 = vld [vmem:[%s306 + $0x90] sm:$0xff]
        %v1011 = vld [vmem:[%s306 + $0xa0] sm:$0xff]
        %v1012 = vld [vmem:[%s306 + $0xa8] sm:$0xff]
        %v1013 = vld [vmem:[%s306 + $0xb0] sm:$0xff]
        %v1014 = vld [vmem:[%s306 + $0xc0] sm:$0xff]
        %v1015 = vld [vmem:[%s306 + $0xc8] sm:$0xff]
        %v1016 = vld [vmem:[%s306 + $0xd0] sm:$0xff]
        %v1017 = vld [vmem:[%s306 + $0xe0] sm:$0xff]
        %v1018 = vld [vmem:[%s306 + $0xe8] sm:$0xff]
        %v1019 = vld [vmem:[%s306 + $0xf0] sm:$0xff]
        %v1020 = vld [vmem:[%s306 + $0x100] sm:$0xff]
        %v1021 = vld [vmem:[%s306 + $0x108] sm:$0xff]
        %v1022 = vld [vmem:[%s306 + $0x110] sm:$0xff]
        %v1023 = vld [vmem:[%s306 + $0x120] sm:$0xff]
        %v1024 = vld [vmem:[%s306 + $0x128] sm:$0xff]
        %v1025 = vld [vmem:[%s306 + $0x130] sm:$0xff]
        %1027 = vset.pattern.permute.xlu0 0
        %1028 = vperm.xlu0 %1027, %v996
        %v1029 = vpop.permute.xlu0 %1028
        %1032 = vset.pattern.permute.xlu0 0
        %1033 = vperm.xlu0 %1032, %v997
        %v1034 = vpop.permute.xlu0 %1033
        %1037 = vset.pattern.permute.xlu0 0
        %1038 = vperm.xlu0 %1037, %v998
        %v1039 = vpop.permute.xlu0 %1038
        %1042 = vset.pattern.permute.xlu0 0
        %1043 = vperm.xlu0 %1042, %v999
        %v1044 = vpop.permute.xlu0 %1043
        %1047 = vset.pattern.permute.xlu0 0
        %1048 = vperm.xlu0 %1047, %v1000
        %v1049 = vpop.permute.xlu0 %1048
        %1052 = vset.pattern.permute.xlu0 0
        %1053 = vperm.xlu0 %1052, %v1001
        %v1054 = vpop.permute.xlu0 %1053
        %1057 = vset.pattern.permute.xlu0 0
        %1058 = vperm.xlu0 %1057, %v1002
        %v1059 = vpop.permute.xlu0 %1058
        %1062 = vset.pattern.permute.xlu0 0
        %1063 = vperm.xlu0 %1062, %v1003
        %v1064 = vpop.permute.xlu0 %1063
        %1067 = vset.pattern.permute.xlu0 0
        %1068 = vperm.xlu0 %1067, %v1004
        %v1069 = vpop.permute.xlu0 %1068
        %1072 = vset.pattern.permute.xlu0 0
        %1073 = vperm.xlu0 %1072, %v1005
        %v1074 = vpop.permute.xlu0 %1073
        %1077 = vset.pattern.permute.xlu0 0
        %1078 = vperm.xlu0 %1077, %v1006
        %v1079 = vpop.permute.xlu0 %1078
        %1082 = vset.pattern.permute.xlu0 0
        %1083 = vperm.xlu0 %1082, %v1007
        %v1084 = vpop.permute.xlu0 %1083
        %1087 = vset.pattern.permute.xlu0 0
        %1088 = vperm.xlu0 %1087, %v1008
        %v1089 = vpop.permute.xlu0 %1088
        %1092 = vset.pattern.permute.xlu0 0
        %1093 = vperm.xlu0 %1092, %v1009
        %v1094 = vpop.permute.xlu0 %1093
        %1097 = vset.pattern.permute.xlu0 0
        %1098 = vperm.xlu0 %1097, %v1010
        %v1099 = vpop.permute.xlu0 %1098
        %1102 = vset.pattern.permute.xlu0 0
        %1103 = vperm.xlu0 %1102, %v1011
        %v1104 = vpop.permute.xlu0 %1103
        %1107 = vset.pattern.permute.xlu0 0
        %1108 = vperm.xlu0 %1107, %v1012
        %v1109 = vpop.permute.xlu0 %1108
        %1112 = vset.pattern.permute.xlu0 0
        %1113 = vperm.xlu0 %1112, %v1013
        %v1114 = vpop.permute.xlu0 %1113
        %1117 = vset.pattern.permute.xlu0 0
        %1118 = vperm.xlu0 %1117, %v1014
        %v1119 = vpop.permute.xlu0 %1118
        %1122 = vset.pattern.permute.xlu0 0
        %1123 = vperm.xlu0 %1122, %v1015
        %v1124 = vpop.permute.xlu0 %1123
        %1127 = vset.pattern.permute.xlu0 0
        %1128 = vperm.xlu0 %1127, %v1016
        %v1129 = vpop.permute.xlu0 %1128
        %1132 = vset.pattern.permute.xlu0 0
        %1133 = vperm.xlu0 %1132, %v1017
        %v1134 = vpop.permute.xlu0 %1133
        %1137 = vset.pattern.permute.xlu0 0
        %1138 = vperm.xlu0 %1137, %v1018
        %v1139 = vpop.permute.xlu0 %1138
        %1142 = vset.pattern.permute.xlu0 0
        %1143 = vperm.xlu0 %1142, %v1019
        %v1144 = vpop.permute.xlu0 %1143
        %1147 = vset.pattern.permute.xlu0 0
        %1148 = vperm.xlu0 %1147, %v1020
        %v1149 = vpop.permute.xlu0 %1148
        %1152 = vset.pattern.permute.xlu0 0
        %1153 = vperm.xlu0 %1152, %v1021
        %v1154 = vpop.permute.xlu0 %1153
        %1157 = vset.pattern.permute.xlu0 0
        %1158 = vperm.xlu0 %1157, %v1022
        %v1159 = vpop.permute.xlu0 %1158
        %1162 = vset.pattern.permute.xlu0 0
        %1163 = vperm.xlu0 %1162, %v1023
        %v1164 = vpop.permute.xlu0 %1163
        %1167 = vset.pattern.permute.xlu0 0
        %1168 = vperm.xlu0 %1167, %v1024
        %v1169 = vpop.permute.xlu0 %1168
        %1172 = vset.pattern.permute.xlu0 0
        %1173 = vperm.xlu0 %1172, %v1025
        %v1174 = vpop.permute.xlu0 %1173
        %v1176 = vmul.f32 %v966, %v1029
        %v1177 = vmul.f32 %v967, %v1034
        %v1178 = vmul.f32 %v968, %v1039
        %v1179 = vmul.f32 %v969, %v1044
        %v1180 = vmul.f32 %v970, %v1049
        %v1181 = vmul.f32 %v971, %v1054
        %v1182 = vmul.f32 %v972, %v1059
        %v1183 = vmul.f32 %v973, %v1064
        %v1184 = vmul.f32 %v974, %v1069
        %v1185 = vmul.f32 %v975, %v1074
        %v1186 = vmul.f32 %v976, %v1079
        %v1187 = vmul.f32 %v977, %v1084
        %v1188 = vmul.f32 %v978, %v1089
        %v1189 = vmul.f32 %v979, %v1094
        %v1190 = vmul.f32 %v980, %v1099
        %v1191 = vmul.f32 %v981, %v1104
        %v1192 = vmul.f32 %v982, %v1109
        %v1193 = vmul.f32 %v983, %v1114
        %v1194 = vmul.f32 %v984, %v1119
        %v1195 = vmul.f32 %v985, %v1124
        %v1196 = vmul.f32 %v986, %v1129
        %v1197 = vmul.f32 %v987, %v1134
        %v1198 = vmul.f32 %v988, %v1139
        %v1199 = vmul.f32 %v989, %v1144
        %v1200 = vmul.f32 %v990, %v1149
        %v1201 = vmul.f32 %v991, %v1154
        %v1202 = vmul.f32 %v992, %v1159
        %v1203 = vmul.f32 %v993, %v1164
        %v1204 = vmul.f32 %v994, %v1169
        %v1205 = vmul.f32 %v995, %v1174
        %v1206 = vld [vmem:[%s4] sm:$0xff]
        %v1207 = vld [vmem:[%s4 + $0x8] sm:$0x1]
        %v1208 = vld [vmem:[%s5] sm:$0x1]
        %v1209 = vlaneseq
        %v1210 = vshrl.u32 %v1209, 7
        %v1211 = vsub.s32 0, %v1210
        %v1212 = vrot.slane %v1206, %v1211
        %v1213 = vmul.f32 %v1176, %v1212
        %v1214 = vmul.f32 %v1177, %v1212
        %v1215 = vmul.f32 %v1179, %v1212
        %v1216 = vmul.f32 %v1180, %v1212
        %v1217 = vmul.f32 %v1182, %v1212
        %v1218 = vmul.f32 %v1183, %v1212
        %v1219 = vmul.f32 %v1185, %v1212
        %v1220 = vmul.f32 %v1186, %v1212
        %v1221 = vmul.f32 %v1188, %v1212
        %v1222 = vmul.f32 %v1189, %v1212
        %v1223 = vmul.f32 %v1191, %v1212
        %v1224 = vmul.f32 %v1192, %v1212
        %v1225 = vmul.f32 %v1194, %v1212
        %v1226 = vmul.f32 %v1195, %v1212
        %v1227 = vmul.f32 %v1197, %v1212
        %v1228 = vmul.f32 %v1198, %v1212
        %v1230 = vlaneseq
        %v1231 = vshrl.u32 %v1230, 7
        %v1232 = vsub.s32 0, %v1231
        %v1233 = vrot.slane %v1208, %v1232
        %v1235 = vadd.f32 %v1213, %v1233
        %v1236 = vadd.f32 %v1214, %v1233
        %v1237 = vadd.f32 %v1215, %v1233
        %v1238 = vadd.f32 %v1216, %v1233
        %v1239 = vadd.f32 %v1217, %v1233
        %v1240 = vadd.f32 %v1218, %v1233
        %v1241 = vadd.f32 %v1219, %v1233
        %v1242 = vadd.f32 %v1220, %v1233
        %v1243 = vadd.f32 %v1221, %v1233
        %v1244 = vadd.f32 %v1222, %v1233
        %v1245 = vadd.f32 %v1223, %v1233
        %v1246 = vadd.f32 %v1224, %v1233
        %v1247 = vadd.f32 %v1225, %v1233
        %v1248 = vadd.f32 %v1226, %v1233
        %v1249 = vadd.f32 %v1227, %v1233
        %v1250 = vadd.f32 %v1228, %v1233
        %v1251 = vlaneseq
        %v1252 = vshrl.u32 %v1251, 7
        %v1253 = vsub.s32 3, %v1252
        %v1254 = vrot.slane %v1206, %v1253
        %v1255 = vmul.f32 %v1179, %v1254
        %v1256 = vmul.f32 %v1180, %v1254
        %v1257 = vmul.f32 %v1182, %v1254
        %v1258 = vmul.f32 %v1183, %v1254
        %v1259 = vmul.f32 %v1185, %v1254
        %v1260 = vmul.f32 %v1186, %v1254
        %v1261 = vmul.f32 %v1188, %v1254
        %v1262 = vmul.f32 %v1189, %v1254
        %v1263 = vmul.f32 %v1191, %v1254
        %v1264 = vmul.f32 %v1192, %v1254
        %v1265 = vmul.f32 %v1194, %v1254
        %v1266 = vmul.f32 %v1195, %v1254
        %v1267 = vmul.f32 %v1197, %v1254
        %v1268 = vmul.f32 %v1198, %v1254
        %v1269 = vmul.f32 %v1200, %v1254
        %v1270 = vmul.f32 %v1201, %v1254
        %v1271 = vadd.f32 %v1235, %v1255
        %v1272 = vadd.f32 %v1236, %v1256
        %v1273 = vadd.f32 %v1237, %v1257
        %v1274 = vadd.f32 %v1238, %v1258
        %v1275 = vadd.f32 %v1239, %v1259
        %v1276 = vadd.f32 %v1240, %v1260
        %v1277 = vadd.f32 %v1241, %v1261
        %v1278 = vadd.f32 %v1242, %v1262
        %v1279 = vadd.f32 %v1243, %v1263
        %v1280 = vadd.f32 %v1244, %v1264
        %v1281 = vadd.f32 %v1245, %v1265
        %v1282 = vadd.f32 %v1246, %v1266
        %v1283 = vadd.f32 %v1247, %v1267
        %v1284 = vadd.f32 %v1248, %v1268
        %v1285 = vadd.f32 %v1249, %v1269
        %v1286 = vadd.f32 %v1250, %v1270
        %v1287 = vlaneseq
        %v1288 = vshrl.u32 %v1287, 7
        %v1289 = vsub.s32 6, %v1288
        %v1290 = vrot.slane %v1206, %v1289
        %v1291 = vmul.f32 %v1182, %v1290
        %v1292 = vmul.f32 %v1183, %v1290
        %v1293 = vmul.f32 %v1185, %v1290
        %v1294 = vmul.f32 %v1186, %v1290
        %v1295 = vmul.f32 %v1188, %v1290
        %v1296 = vmul.f32 %v1189, %v1290
        %v1297 = vmul.f32 %v1191, %v1290
        %v1298 = vmul.f32 %v1192, %v1290
        %v1299 = vmul.f32 %v1194, %v1290
        %v1300 = vmul.f32 %v1195, %v1290
        %v1301 = vmul.f32 %v1197, %v1290
        %v1302 = vmul.f32 %v1198, %v1290
        %v1303 = vmul.f32 %v1200, %v1290
        %v1304 = vmul.f32 %v1201, %v1290
        %v1305 = vmul.f32 %v1203, %v1290
        %v1306 = vmul.f32 %v1204, %v1290
        %v1307 = vadd.f32 %v1271, %v1291
        %v1308 = vadd.f32 %v1272, %v1292
        %v1309 = vadd.f32 %v1273, %v1293
        %v1310 = vadd.f32 %v1274, %v1294
        %v1311 = vadd.f32 %v1275, %v1295
        %v1312 = vadd.f32 %v1276, %v1296
        %v1313 = vadd.f32 %v1277, %v1297
        %v1314 = vadd.f32 %v1278, %v1298
        %v1315 = vadd.f32 %v1279, %v1299
        %v1316 = vadd.f32 %v1280, %v1300
        %v1317 = vadd.f32 %v1281, %v1301
        %v1318 = vadd.f32 %v1282, %v1302
        %v1319 = vadd.f32 %v1283, %v1303
        %v1320 = vadd.f32 %v1284, %v1304
        %v1321 = vadd.f32 %v1285, %v1305
        %v1322 = vadd.f32 %v1286, %v1306
        %v1323 = vlaneseq
        %v1324 = vshrl.u32 %v1323, 7
        %v1325 = vsub.s32 1, %v1324
        %v1326 = vrot.slane %v1206, %v1325
        %v1327 = vmul.f32 %v1176, %v1326
        %v1328 = vmul.f32 %v1177, %v1326
        %v1329 = vmul.f32 %v1178, %v1326
        %v1330 = vmul.f32 %v1179, %v1326
        %v1331 = vmul.f32 %v1180, %v1326
        %v1332 = vmul.f32 %v1181, %v1326
        %v1333 = vmul.f32 %v1182, %v1326
        %v1334 = vmul.f32 %v1183, %v1326
        %v1335 = vmul.f32 %v1184, %v1326
        %v1336 = vmul.f32 %v1185, %v1326
        %v1337 = vmul.f32 %v1186, %v1326
        %v1338 = vmul.f32 %v1187, %v1326
        %v1339 = vmul.f32 %v1188, %v1326
        %v1340 = vmul.f32 %v1189, %v1326
        %v1341 = vmul.f32 %v1190, %v1326
        %v1342 = vmul.f32 %v1191, %v1326
        %v1343 = vmul.f32 %v1192, %v1326
        %v1344 = vmul.f32 %v1193, %v1326
        %v1345 = vmul.f32 %v1194, %v1326
        %v1346 = vmul.f32 %v1195, %v1326
        %v1347 = vmul.f32 %v1196, %v1326
        %v1348 = vmul.f32 %v1197, %v1326
        %v1349 = vmul.f32 %v1198, %v1326
        %v1350 = vmul.f32 %v1199, %v1326
        %vm1375 = vcmask 1046528
        %v1376 = vrot.slane %v1327, 1
        %v1377 = vrot.slane %v1328, 1
        %v1378 = vsel %vm1375, %v1376, %v1377
        %v1379 = vrot.slane %v1329, 1
        %v1380 = vsel %vm1375, %v1377, %v1379
        %v1381 = vrot.slane %v1330, 1
        %v1382 = vrot.slane %v1331, 1
        %v1383 = vsel %vm1375, %v1381, %v1382
        %v1384 = vrot.slane %v1332, 1
        %v1385 = vsel %vm1375, %v1382, %v1384
        %v1386 = vrot.slane %v1333, 1
        %v1387 = vrot.slane %v1334, 1
        %v1388 = vsel %vm1375, %v1386, %v1387
        %v1389 = vrot.slane %v1335, 1
        %v1390 = vsel %vm1375, %v1387, %v1389
        %v1391 = vrot.slane %v1336, 1
        %v1392 = vrot.slane %v1337, 1
        %v1393 = vsel %vm1375, %v1391, %v1392
        %v1394 = vrot.slane %v1338, 1
        %v1395 = vsel %vm1375, %v1392, %v1394
        %v1396 = vrot.slane %v1339, 1
        %v1397 = vrot.slane %v1340, 1
        %v1398 = vsel %vm1375, %v1396, %v1397
        %v1399 = vrot.slane %v1341, 1
        %v1400 = vsel %vm1375, %v1397, %v1399
        %v1401 = vrot.slane %v1342, 1
        %v1402 = vrot.slane %v1343, 1
        %v1403 = vsel %vm1375, %v1401, %v1402
        %v1404 = vrot.slane %v1344, 1
        %v1405 = vsel %vm1375, %v1402, %v1404
        %v1406 = vrot.slane %v1345, 1
        %v1407 = vrot.slane %v1346, 1
        %v1408 = vsel %vm1375, %v1406, %v1407
        %v1409 = vrot.slane %v1347, 1
        %v1410 = vsel %vm1375, %v1407, %v1409
        %v1411 = vrot.slane %v1348, 1
        %v1412 = vrot.slane %v1349, 1
        %v1413 = vsel %vm1375, %v1411, %v1412
        %v1414 = vrot.slane %v1350, 1
        %v1415 = vsel %vm1375, %v1412, %v1414
        %v1432 = vadd.f32 %v1307, %v1378
        %v1433 = vadd.f32 %v1308, %v1380
        %v1434 = vadd.f32 %v1309, %v1383
        %v1435 = vadd.f32 %v1310, %v1385
        %v1436 = vadd.f32 %v1311, %v1388
        %v1437 = vadd.f32 %v1312, %v1390
        %v1438 = vadd.f32 %v1313, %v1393
        %v1439 = vadd.f32 %v1314, %v1395
        %v1440 = vadd.f32 %v1315, %v1398
        %v1441 = vadd.f32 %v1316, %v1400
        %v1442 = vadd.f32 %v1317, %v1403
        %v1443 = vadd.f32 %v1318, %v1405
        %v1444 = vadd.f32 %v1319, %v1408
        %v1445 = vadd.f32 %v1320, %v1410
        %v1446 = vadd.f32 %v1321, %v1413
        %v1447 = vadd.f32 %v1322, %v1415
        %v1448 = vlaneseq
        %v1449 = vshrl.u32 %v1448, 7
        %v1450 = vsub.s32 4, %v1449
        %v1451 = vrot.slane %v1206, %v1450
        %v1452 = vmul.f32 %v1179, %v1451
        %v1453 = vmul.f32 %v1180, %v1451
        %v1454 = vmul.f32 %v1181, %v1451
        %v1455 = vmul.f32 %v1182, %v1451
        %v1456 = vmul.f32 %v1183, %v1451
        %v1457 = vmul.f32 %v1184, %v1451
        %v1458 = vmul.f32 %v1185, %v1451
        %v1459 = vmul.f32 %v1186, %v1451
        %v1460 = vmul.f32 %v1187, %v1451
        %v1461 = vmul.f32 %v1188, %v1451
        %v1462 = vmul.f32 %v1189, %v1451
        %v1463 = vmul.f32 %v1190, %v1451
        %v1464 = vmul.f32 %v1191, %v1451
        %v1465 = vmul.f32 %v1192, %v1451
        %v1466 = vmul.f32 %v1193, %v1451
        %v1467 = vmul.f32 %v1194, %v1451
        %v1468 = vmul.f32 %v1195, %v1451
        %v1469 = vmul.f32 %v1196, %v1451
        %v1470 = vmul.f32 %v1197, %v1451
        %v1471 = vmul.f32 %v1198, %v1451
        %v1472 = vmul.f32 %v1199, %v1451
        %v1473 = vmul.f32 %v1200, %v1451
        %v1474 = vmul.f32 %v1201, %v1451
        %v1475 = vmul.f32 %v1202, %v1451
        %v1500 = vrot.slane %v1452, 1
        %v1501 = vrot.slane %v1453, 1
        %v1502 = vsel %vm1375, %v1500, %v1501
        %v1503 = vrot.slane %v1454, 1
        %v1504 = vsel %vm1375, %v1501, %v1503
        %v1505 = vrot.slane %v1455, 1
        %v1506 = vrot.slane %v1456, 1
        %v1507 = vsel %vm1375, %v1505, %v1506
        %v1508 = vrot.slane %v1457, 1
        %v1509 = vsel %vm1375, %v1506, %v1508
        %v1510 = vrot.slane %v1458, 1
        %v1511 = vrot.slane %v1459, 1
        %v1512 = vsel %vm1375, %v1510, %v1511
        %v1513 = vrot.slane %v1460, 1
        %v1514 = vsel %vm1375, %v1511, %v1513
        %v1515 = vrot.slane %v1461, 1
        %v1516 = vrot.slane %v1462, 1
        %v1517 = vsel %vm1375, %v1515, %v1516
        %v1518 = vrot.slane %v1463, 1
        %v1519 = vsel %vm1375, %v1516, %v1518
        %v1520 = vrot.slane %v1464, 1
        %v1521 = vrot.slane %v1465, 1
        %v1522 = vsel %vm1375, %v1520, %v1521
        %v1523 = vrot.slane %v1466, 1
        %v1524 = vsel %vm1375, %v1521, %v1523
        %v1525 = vrot.slane %v1467, 1
        %v1526 = vrot.slane %v1468, 1
        %v1527 = vsel %vm1375, %v1525, %v1526
        %v1528 = vrot.slane %v1469, 1
        %v1529 = vsel %vm1375, %v1526, %v1528
        %v1530 = vrot.slane %v1470, 1
        %v1531 = vrot.slane %v1471, 1
        %v1532 = vsel %vm1375, %v1530, %v1531
        %v1533 = vrot.slane %v1472, 1
        %v1534 = vsel %vm1375, %v1531, %v1533
        %v1535 = vrot.slane %v1473, 1
        %v1536 = vrot.slane %v1474, 1
        %v1537 = vsel %vm1375, %v1535, %v1536
        %v1538 = vrot.slane %v1475, 1
        %v1539 = vsel %vm1375, %v1536, %v1538
        %v1556 = vadd.f32 %v1432, %v1502
        %v1557 = vadd.f32 %v1433, %v1504
        %v1558 = vadd.f32 %v1434, %v1507
        %v1559 = vadd.f32 %v1435, %v1509
        %v1560 = vadd.f32 %v1436, %v1512
        %v1561 = vadd.f32 %v1437, %v1514
        %v1562 = vadd.f32 %v1438, %v1517
        %v1563 = vadd.f32 %v1439, %v1519
        %v1564 = vadd.f32 %v1440, %v1522
        %v1565 = vadd.f32 %v1441, %v1524
        %v1566 = vadd.f32 %v1442, %v1527
        %v1567 = vadd.f32 %v1443, %v1529
        %v1568 = vadd.f32 %v1444, %v1532
        %v1569 = vadd.f32 %v1445, %v1534
        %v1570 = vadd.f32 %v1446, %v1537
        %v1571 = vadd.f32 %v1447, %v1539
        %v1572 = vlaneseq
        %v1573 = vshrl.u32 %v1572, 7
        %v1574 = vsub.s32 7, %v1573
        %v1575 = vrot.slane %v1206, %v1574
        %v1576 = vmul.f32 %v1182, %v1575
        %v1577 = vmul.f32 %v1183, %v1575
        %v1578 = vmul.f32 %v1184, %v1575
        %v1579 = vmul.f32 %v1185, %v1575
        %v1580 = vmul.f32 %v1186, %v1575
        %v1581 = vmul.f32 %v1187, %v1575
        %v1582 = vmul.f32 %v1188, %v1575
        %v1583 = vmul.f32 %v1189, %v1575
        %v1584 = vmul.f32 %v1190, %v1575
        %v1585 = vmul.f32 %v1191, %v1575
        %v1586 = vmul.f32 %v1192, %v1575
        %v1587 = vmul.f32 %v1193, %v1575
        %v1588 = vmul.f32 %v1194, %v1575
        %v1589 = vmul.f32 %v1195, %v1575
        %v1590 = vmul.f32 %v1196, %v1575
        %v1591 = vmul.f32 %v1197, %v1575
        %v1592 = vmul.f32 %v1198, %v1575
        %v1593 = vmul.f32 %v1199, %v1575
        %v1594 = vmul.f32 %v1200, %v1575
        %v1595 = vmul.f32 %v1201, %v1575
        %v1596 = vmul.f32 %v1202, %v1575
        %v1597 = vmul.f32 %v1203, %v1575
        %v1598 = vmul.f32 %v1204, %v1575
        %v1599 = vmul.f32 %v1205, %v1575
        %v1624 = vrot.slane %v1576, 1
        %v1625 = vrot.slane %v1577, 1
        %v1626 = vsel %vm1375, %v1624, %v1625
        %v1627 = vrot.slane %v1578, 1
        %v1628 = vsel %vm1375, %v1625, %v1627
        %v1629 = vrot.slane %v1579, 1
        %v1630 = vrot.slane %v1580, 1
        %v1631 = vsel %vm1375, %v1629, %v1630
        %v1632 = vrot.slane %v1581, 1
        %v1633 = vsel %vm1375, %v1630, %v1632
        %v1634 = vrot.slane %v1582, 1
        %v1635 = vrot.slane %v1583, 1
        %v1636 = vsel %vm1375, %v1634, %v1635
        %v1637 = vrot.slane %v1584, 1
        %v1638 = vsel %vm1375, %v1635, %v1637
        %v1639 = vrot.slane %v1585, 1
        %v1640 = vrot.slane %v1586, 1
        %v1641 = vsel %vm1375, %v1639, %v1640
        %v1642 = vrot.slane %v1587, 1
        %v1643 = vsel %vm1375, %v1640, %v1642
        %v1644 = vrot.slane %v1588, 1
        %v1645 = vrot.slane %v1589, 1
        %v1646 = vsel %vm1375, %v1644, %v1645
        %v1647 = vrot.slane %v1590, 1
        %v1648 = vsel %vm1375, %v1645, %v1647
        %v1649 = vrot.slane %v1591, 1
        %v1650 = vrot.slane %v1592, 1
        %v1651 = vsel %vm1375, %v1649, %v1650
        %v1652 = vrot.slane %v1593, 1
        %v1653 = vsel %vm1375, %v1650, %v1652
        %v1654 = vrot.slane %v1594, 1
        %v1655 = vrot.slane %v1595, 1
        %v1656 = vsel %vm1375, %v1654, %v1655
        %v1657 = vrot.slane %v1596, 1
        %v1658 = vsel %vm1375, %v1655, %v1657
        %v1659 = vrot.slane %v1597, 1
        %v1660 = vrot.slane %v1598, 1
        %v1661 = vsel %vm1375, %v1659, %v1660
        %v1662 = vrot.slane %v1599, 1
        %v1663 = vsel %vm1375, %v1660, %v1662
        %v1680 = vadd.f32 %v1556, %v1626
        %v1681 = vadd.f32 %v1557, %v1628
        %v1682 = vadd.f32 %v1558, %v1631
        %v1683 = vadd.f32 %v1559, %v1633
        %v1684 = vadd.f32 %v1560, %v1636
        %v1685 = vadd.f32 %v1561, %v1638
        %v1686 = vadd.f32 %v1562, %v1641
        %v1687 = vadd.f32 %v1563, %v1643
        %v1688 = vadd.f32 %v1564, %v1646
        %v1689 = vadd.f32 %v1565, %v1648
        %v1690 = vadd.f32 %v1566, %v1651
        %v1691 = vadd.f32 %v1567, %v1653
        %v1692 = vadd.f32 %v1568, %v1656
        %v1693 = vadd.f32 %v1569, %v1658
        %v1694 = vadd.f32 %v1570, %v1661
        %v1695 = vadd.f32 %v1571, %v1663
        %v1696 = vlaneseq
        %v1697 = vshrl.u32 %v1696, 7
        %v1698 = vsub.s32 2, %v1697
        %v1699 = vrot.slane %v1206, %v1698
        %v1700 = vmul.f32 %v1176, %v1699
        %v1701 = vmul.f32 %v1177, %v1699
        %v1702 = vmul.f32 %v1178, %v1699
        %v1703 = vmul.f32 %v1179, %v1699
        %v1704 = vmul.f32 %v1180, %v1699
        %v1705 = vmul.f32 %v1181, %v1699
        %v1706 = vmul.f32 %v1182, %v1699
        %v1707 = vmul.f32 %v1183, %v1699
        %v1708 = vmul.f32 %v1184, %v1699
        %v1709 = vmul.f32 %v1185, %v1699
        %v1710 = vmul.f32 %v1186, %v1699
        %v1711 = vmul.f32 %v1187, %v1699
        %v1712 = vmul.f32 %v1188, %v1699
        %v1713 = vmul.f32 %v1189, %v1699
        %v1714 = vmul.f32 %v1190, %v1699
        %v1715 = vmul.f32 %v1191, %v1699
        %v1716 = vmul.f32 %v1192, %v1699
        %v1717 = vmul.f32 %v1193, %v1699
        %v1718 = vmul.f32 %v1194, %v1699
        %v1719 = vmul.f32 %v1195, %v1699
        %v1720 = vmul.f32 %v1196, %v1699
        %v1721 = vmul.f32 %v1197, %v1699
        %v1722 = vmul.f32 %v1198, %v1699
        %v1723 = vmul.f32 %v1199, %v1699
        %vm1748 = vcmask 1045504
        %v1749 = vrot.slane %v1700, 2
        %v1750 = vrot.slane %v1701, 2
        %v1751 = vsel %vm1748, %v1749, %v1750
        %v1752 = vrot.slane %v1702, 2
        %v1753 = vsel %vm1748, %v1750, %v1752
        %v1754 = vrot.slane %v1703, 2
        %v1755 = vrot.slane %v1704, 2
        %v1756 = vsel %vm1748, %v1754, %v1755
        %v1757 = vrot.slane %v1705, 2
        %v1758 = vsel %vm1748, %v1755, %v1757
        %v1759 = vrot.slane %v1706, 2
        %v1760 = vrot.slane %v1707, 2
        %v1761 = vsel %vm1748, %v1759, %v1760
        %v1762 = vrot.slane %v1708, 2
        %v1763 = vsel %vm1748, %v1760, %v1762
        %v1764 = vrot.slane %v1709, 2
        %v1765 = vrot.slane %v1710, 2
        %v1766 = vsel %vm1748, %v1764, %v1765
        %v1767 = vrot.slane %v1711, 2
        %v1768 = vsel %vm1748, %v1765, %v1767
        %v1769 = vrot.slane %v1712, 2
        %v1770 = vrot.slane %v1713, 2
        %v1771 = vsel %vm1748, %v1769, %v1770
        %v1772 = vrot.slane %v1714, 2
        %v1773 = vsel %vm1748, %v1770, %v1772
        %v1774 = vrot.slane %v1715, 2
        %v1775 = vrot.slane %v1716, 2
        %v1776 = vsel %vm1748, %v1774, %v1775
        %v1777 = vrot.slane %v1717, 2
        %v1778 = vsel %vm1748, %v1775, %v1777
        %v1779 = vrot.slane %v1718, 2
        %v1780 = vrot.slane %v1719, 2
        %v1781 = vsel %vm1748, %v1779, %v1780
        %v1782 = vrot.slane %v1720, 2
        %v1783 = vsel %vm1748, %v1780, %v1782
        %v1784 = vrot.slane %v1721, 2
        %v1785 = vrot.slane %v1722, 2
        %v1786 = vsel %vm1748, %v1784, %v1785
        %v1787 = vrot.slane %v1723, 2
        %v1788 = vsel %vm1748, %v1785, %v1787
        %v1805 = vadd.f32 %v1680, %v1751
        %v1806 = vadd.f32 %v1681, %v1753
        %v1807 = vadd.f32 %v1682, %v1756
        %v1808 = vadd.f32 %v1683, %v1758
        %v1809 = vadd.f32 %v1684, %v1761
        %v1810 = vadd.f32 %v1685, %v1763
        %v1811 = vadd.f32 %v1686, %v1766
        %v1812 = vadd.f32 %v1687, %v1768
        %v1813 = vadd.f32 %v1688, %v1771
        %v1814 = vadd.f32 %v1689, %v1773
        %v1815 = vadd.f32 %v1690, %v1776
        %v1816 = vadd.f32 %v1691, %v1778
        %v1817 = vadd.f32 %v1692, %v1781
        %v1818 = vadd.f32 %v1693, %v1783
        %v1819 = vadd.f32 %v1694, %v1786
        %v1820 = vadd.f32 %v1695, %v1788
        %v1821 = vlaneseq
        %v1822 = vshrl.u32 %v1821, 7
        %v1823 = vsub.s32 5, %v1822
        %v1824 = vrot.slane %v1206, %v1823
        %v1825 = vmul.f32 %v1179, %v1824
        %v1826 = vmul.f32 %v1180, %v1824
        %v1827 = vmul.f32 %v1181, %v1824
        %v1828 = vmul.f32 %v1182, %v1824
        %v1829 = vmul.f32 %v1183, %v1824
        %v1830 = vmul.f32 %v1184, %v1824
        %v1831 = vmul.f32 %v1185, %v1824
        %v1832 = vmul.f32 %v1186, %v1824
        %v1833 = vmul.f32 %v1187, %v1824
        %v1834 = vmul.f32 %v1188, %v1824
        %v1835 = vmul.f32 %v1189, %v1824
        %v1836 = vmul.f32 %v1190, %v1824
        %v1837 = vmul.f32 %v1191, %v1824
        %v1838 = vmul.f32 %v1192, %v1824
        %v1839 = vmul.f32 %v1193, %v1824
        %v1840 = vmul.f32 %v1194, %v1824
        %v1841 = vmul.f32 %v1195, %v1824
        %v1842 = vmul.f32 %v1196, %v1824
        %v1843 = vmul.f32 %v1197, %v1824
        %v1844 = vmul.f32 %v1198, %v1824
        %v1845 = vmul.f32 %v1199, %v1824
        %v1846 = vmul.f32 %v1200, %v1824
        %v1847 = vmul.f32 %v1201, %v1824
        %v1848 = vmul.f32 %v1202, %v1824
        %v1873 = vrot.slane %v1825, 2
        %v1874 = vrot.slane %v1826, 2
        %v1875 = vsel %vm1748, %v1873, %v1874
        %v1876 = vrot.slane %v1827, 2
        %v1877 = vsel %vm1748, %v1874, %v1876
        %v1878 = vrot.slane %v1828, 2
        %v1879 = vrot.slane %v1829, 2
        %v1880 = vsel %vm1748, %v1878, %v1879
        %v1881 = vrot.slane %v1830, 2
        %v1882 = vsel %vm1748, %v1879, %v1881
        %v1883 = vrot.slane %v1831, 2
        %v1884 = vrot.slane %v1832, 2
        %v1885 = vsel %vm1748, %v1883, %v1884
        %v1886 = vrot.slane %v1833, 2
        %v1887 = vsel %vm1748, %v1884, %v1886
        %v1888 = vrot.slane %v1834, 2
        %v1889 = vrot.slane %v1835, 2
        %v1890 = vsel %vm1748, %v1888, %v1889
        %v1891 = vrot.slane %v1836, 2
        %v1892 = vsel %vm1748, %v1889, %v1891
        %v1893 = vrot.slane %v1837, 2
        %v1894 = vrot.slane %v1838, 2
        %v1895 = vsel %vm1748, %v1893, %v1894
        %v1896 = vrot.slane %v1839, 2
        %v1897 = vsel %vm1748, %v1894, %v1896
        %v1898 = vrot.slane %v1840, 2
        %v1899 = vrot.slane %v1841, 2
        %v1900 = vsel %vm1748, %v1898, %v1899
        %v1901 = vrot.slane %v1842, 2
        %v1902 = vsel %vm1748, %v1899, %v1901
        %v1903 = vrot.slane %v1843, 2
        %v1904 = vrot.slane %v1844, 2
        %v1905 = vsel %vm1748, %v1903, %v1904
        %v1906 = vrot.slane %v1845, 2
        %v1907 = vsel %vm1748, %v1904, %v1906
        %v1908 = vrot.slane %v1846, 2
        %v1909 = vrot.slane %v1847, 2
        %v1910 = vsel %vm1748, %v1908, %v1909
        %v1911 = vrot.slane %v1848, 2
        %v1912 = vsel %vm1748, %v1909, %v1911
        %v1929 = vadd.f32 %v1805, %v1875
        %v1930 = vadd.f32 %v1806, %v1877
        %v1931 = vadd.f32 %v1807, %v1880
        %v1932 = vadd.f32 %v1808, %v1882
        %v1933 = vadd.f32 %v1809, %v1885
        %v1934 = vadd.f32 %v1810, %v1887
        %v1935 = vadd.f32 %v1811, %v1890
        %v1936 = vadd.f32 %v1812, %v1892
        %v1937 = vadd.f32 %v1813, %v1895
        %v1938 = vadd.f32 %v1814, %v1897
        %v1939 = vadd.f32 %v1815, %v1900
        %v1940 = vadd.f32 %v1816, %v1902
        %v1941 = vadd.f32 %v1817, %v1905
        %v1942 = vadd.f32 %v1818, %v1907
        %v1943 = vadd.f32 %v1819, %v1910
        %v1944 = vadd.f32 %v1820, %v1912
        %v1945 = vlaneseq
        %v1946 = vshrl.u32 %v1945, 7
        %v1947 = vsub.s32 0, %v1946
        %v1948 = vrot.slane %v1207, %v1947
        %v1949 = vmul.f32 %v1182, %v1948
        %v1950 = vmul.f32 %v1183, %v1948
        %v1951 = vmul.f32 %v1184, %v1948
        %v1952 = vmul.f32 %v1185, %v1948
        %v1953 = vmul.f32 %v1186, %v1948
        %v1954 = vmul.f32 %v1187, %v1948
        %v1955 = vmul.f32 %v1188, %v1948
        %v1956 = vmul.f32 %v1189, %v1948
        %v1957 = vmul.f32 %v1190, %v1948
        %v1958 = vmul.f32 %v1191, %v1948
        %v1959 = vmul.f32 %v1192, %v1948
        %v1960 = vmul.f32 %v1193, %v1948
        %v1961 = vmul.f32 %v1194, %v1948
        %v1962 = vmul.f32 %v1195, %v1948
        %v1963 = vmul.f32 %v1196, %v1948
        %v1964 = vmul.f32 %v1197, %v1948
        %v1965 = vmul.f32 %v1198, %v1948
        %v1966 = vmul.f32 %v1199, %v1948
        %v1967 = vmul.f32 %v1200, %v1948
        %v1968 = vmul.f32 %v1201, %v1948
        %v1969 = vmul.f32 %v1202, %v1948
        %v1970 = vmul.f32 %v1203, %v1948
        %v1971 = vmul.f32 %v1204, %v1948
        %v1972 = vmul.f32 %v1205, %v1948
        %v1997 = vrot.slane %v1949, 2
        %v1998 = vrot.slane %v1950, 2
        %v1999 = vsel %vm1748, %v1997, %v1998
        %v2000 = vrot.slane %v1951, 2
        %v2001 = vsel %vm1748, %v1998, %v2000
        %v2002 = vrot.slane %v1952, 2
        %v2003 = vrot.slane %v1953, 2
        %v2004 = vsel %vm1748, %v2002, %v2003
        %v2005 = vrot.slane %v1954, 2
        %v2006 = vsel %vm1748, %v2003, %v2005
        %v2007 = vrot.slane %v1955, 2
        %v2008 = vrot.slane %v1956, 2
        %v2009 = vsel %vm1748, %v2007, %v2008
        %v2010 = vrot.slane %v1957, 2
        %v2011 = vsel %vm1748, %v2008, %v2010
        %v2012 = vrot.slane %v1958, 2
        %v2013 = vrot.slane %v1959, 2
        %v2014 = vsel %vm1748, %v2012, %v2013
        %v2015 = vrot.slane %v1960, 2
        %v2016 = vsel %vm1748, %v2013, %v2015
        %v2017 = vrot.slane %v1961, 2
        %v2018 = vrot.slane %v1962, 2
        %v2019 = vsel %vm1748, %v2017, %v2018
        %v2020 = vrot.slane %v1963, 2
        %v2021 = vsel %vm1748, %v2018, %v2020
        %v2022 = vrot.slane %v1964, 2
        %v2023 = vrot.slane %v1965, 2
        %v2024 = vsel %vm1748, %v2022, %v2023
        %v2025 = vrot.slane %v1966, 2
        %v2026 = vsel %vm1748, %v2023, %v2025
        %v2027 = vrot.slane %v1967, 2
        %v2028 = vrot.slane %v1968, 2
        %v2029 = vsel %vm1748, %v2027, %v2028
        %v2030 = vrot.slane %v1969, 2
        %v2031 = vsel %vm1748, %v2028, %v2030
        %v2032 = vrot.slane %v1970, 2
        %v2033 = vrot.slane %v1971, 2
        %v2034 = vsel %vm1748, %v2032, %v2033
        %v2035 = vrot.slane %v1972, 2
        %v2036 = vsel %vm1748, %v2033, %v2035
        %v2053 = vadd.f32 %v1929, %v1999
        %v2054 = vadd.f32 %v1930, %v2001
        %v2055 = vadd.f32 %v1931, %v2004
        %v2056 = vadd.f32 %v1932, %v2006
        %v2057 = vadd.f32 %v1933, %v2009
        %v2058 = vadd.f32 %v1934, %v2011
        %v2059 = vadd.f32 %v1935, %v2014
        %v2060 = vadd.f32 %v1936, %v2016
        %v2061 = vadd.f32 %v1937, %v2019
        %v2062 = vadd.f32 %v1938, %v2021
        %v2063 = vadd.f32 %v1939, %v2024
        %v2064 = vadd.f32 %v1940, %v2026
        %v2065 = vadd.f32 %v1941, %v2029
        %v2066 = vadd.f32 %v1942, %v2031
        %v2067 = vadd.f32 %v1943, %v2034
        %v2068 = vadd.f32 %v1944, %v2036
        %v2069 = vmax.f32 %v2053, 0.0
        %v2070 = vmax.f32 %v2054, 0.0
        %v2071 = vmax.f32 %v2055, 0.0
        %v2072 = vmax.f32 %v2056, 0.0
        %v2073 = vmax.f32 %v2057, 0.0
        %v2074 = vmax.f32 %v2058, 0.0
        %v2075 = vmax.f32 %v2059, 0.0
        %v2076 = vmax.f32 %v2060, 0.0
        %v2077 = vmax.f32 %v2061, 0.0
        %v2078 = vmax.f32 %v2062, 0.0
        %v2079 = vmax.f32 %v2063, 0.0
        %v2080 = vmax.f32 %v2064, 0.0
        %v2081 = vmax.f32 %v2065, 0.0
        %v2082 = vmax.f32 %v2066, 0.0
        %v2083 = vmax.f32 %v2067, 0.0
        %v2084 = vmax.f32 %v2068, 0.0
        %v2085 = vmin.f32 %v2069, 6.0
        %v2086 = vmin.f32 %v2070, 6.0
        %v2087 = vmin.f32 %v2071, 6.0
        %v2088 = vmin.f32 %v2072, 6.0
        %v2089 = vmin.f32 %v2073, 6.0
        %v2090 = vmin.f32 %v2074, 6.0
        %v2091 = vmin.f32 %v2075, 6.0
        %v2092 = vmin.f32 %v2076, 6.0
        %v2093 = vmin.f32 %v2077, 6.0
        %v2094 = vmin.f32 %v2078, 6.0
        %v2095 = vmin.f32 %v2079, 6.0
        %v2096 = vmin.f32 %v2080, 6.0
        %v2097 = vmin.f32 %v2081, 6.0
        %v2098 = vmin.f32 %v2082, 6.0
        %v2099 = vmin.f32 %v2083, 6.0
        %v2100 = vmin.f32 %v2084, 6.0
        %v2101 = vpack.c.bf16 %v2086, %v2085
        %v2102 = vpack.c.bf16 %v2088, %v2087
        %v2103 = vpack.c.bf16 %v2090, %v2089
        %v2104 = vpack.c.bf16 %v2092, %v2091
        %v2105 = vpack.c.bf16 %v2094, %v2093
        %v2106 = vpack.c.bf16 %v2096, %v2095
        %v2107 = vpack.c.bf16 %v2098, %v2097
        %v2108 = vpack.c.bf16 %v2100, %v2099
        %v2109 = vld [vmem:[#allocation4] sm:$0xf]
        %v2110 = vld [vmem:[#allocation4 + $0x4] sm:$0xf]
        %v2111 = vld [vmem:[#allocation4 + $0x8] sm:$0xf]
        %v2112 = vld [vmem:[#allocation4 + $0xc] sm:$0xf]
        %v2113 = vld [vmem:[#allocation4 + $0x10] sm:$0xf]
        %v2114 = vld [vmem:[#allocation4 + $0x14] sm:$0xf]
        %v2115 = vld [vmem:[#allocation4 + $0x18] sm:$0xf]
        %v2116 = vld [vmem:[#allocation4 + $0x1c] sm:$0xf]
        %v2117 = vld [vmem:[#allocation4 + $0x20] sm:$0xf]
        %v2118 = vld [vmem:[#allocation4 + $0x24] sm:$0xf]
        %v2119 = vld [vmem:[#allocation4 + $0x28] sm:$0xf]
        %v2120 = vld [vmem:[#allocation4 + $0x2c] sm:$0xf]
        %v2121 = vld [vmem:[#allocation4 + $0x30] sm:$0xf]
        %v2122 = vld [vmem:[#allocation4 + $0x34] sm:$0xf]
        %v2123 = vld [vmem:[#allocation4 + $0x38] sm:$0xf]
        %v2124 = vld [vmem:[#allocation4 + $0x3c] sm:$0xf]
        %v2125 = vld [vmem:[%s7] sm:$0x1]
        %v2127 = vlaneseq
        %v2128 = vshrl.u32 %v2127, 7
        %v2129 = vsub.s32 0, %v2128
        %v2130 = vrot.slane %v2125, %v2129
        %v2148 = vunpack.c.l.b16 %v2109
        %v2149 = vunpack.c.l.b16 %v2110
        %v2150 = vunpack.c.l.b16 %v2111
        %v2151 = vunpack.c.l.b16 %v2112
        %v2152 = vunpack.c.l.b16 %v2113
        %v2153 = vunpack.c.l.b16 %v2114
        %v2154 = vunpack.c.l.b16 %v2115
        %v2155 = vunpack.c.l.b16 %v2116
        %v2156 = vunpack.c.l.b16 %v2117
        %v2157 = vunpack.c.l.b16 %v2118
        %v2158 = vunpack.c.l.b16 %v2119
        %v2159 = vunpack.c.l.b16 %v2120
        %v2160 = vunpack.c.l.b16 %v2121
        %v2161 = vunpack.c.l.b16 %v2122
        %v2162 = vunpack.c.l.b16 %v2123
        %v2163 = vunpack.c.l.b16 %v2124
        %v2164 = vpack.c.b16 %v2149, %v2148
        %v2165 = vpack.c.b16 %v2151, %v2150
        %v2166 = vpack.c.b16 %v2153, %v2152
        %v2167 = vpack.c.b16 %v2155, %v2154
        %v2168 = vpack.c.b16 %v2157, %v2156
        %v2169 = vpack.c.b16 %v2159, %v2158
        %v2170 = vpack.c.b16 %v2161, %v2160
        %v2171 = vpack.c.b16 %v2163, %v2162
        %2180 = vmatprep.subr.bf16.mxu0 0
        %2181 = vmatpush1.bf16.msra.mxu0 %v2171
        %2182 = vmatprep.subr.bf16.mxu0 0
        %2183 = vmatpush1.bf16.msra.mxu0 %v2170
        %2184 = vmatprep.subr.bf16.mxu0 0
        %2185 = vmatpush1.bf16.msra.mxu0 %v2169
        %2186 = vmatprep.subr.bf16.mxu0 0
        %2187 = vmatpush1.bf16.msra.mxu0 %v2168
        %2188 = vmatprep.subr.bf16.mxu0 0
        %2189 = vmatpush1.bf16.msra.mxu0 %v2167
        %2190 = vmatprep.subr.bf16.mxu0 0
        %2191 = vmatpush1.bf16.msra.mxu0 %v2166
        %2192 = vmatprep.subr.bf16.mxu0 0
        %2193 = vmatpush1.bf16.msra.mxu0 %v2165
        %2194 = vmatprep.subr.bf16.mxu0 0
        %2195 = vmatpush1.bf16.msra.mxu0 %v2164
        %2196 = vmatprep.subr.bf16.mxu0 0
        %2197 = vmatpush2.bf16.msra.mxu0 0
        %2198 = vmatprep.subr.bf16.mxu0 0
        %2199 = vmatpush2.bf16.msra.mxu0 0
        %2200 = vmatprep.subr.bf16.mxu0 0
        %2201 = vmatpush2.bf16.msra.mxu0 0
        %2202 = vmatprep.subr.bf16.mxu0 0
        %2203 = vmatpush2.bf16.msra.mxu0 0
        %2204 = vmatprep.subr.bf16.mxu0 0
        %2205 = vmatpush2.bf16.msra.mxu0 0
        %2206 = vmatprep.subr.bf16.mxu0 0
        %2207 = vmatpush2.bf16.msra.mxu0 0
        %2208 = vmatprep.subr.bf16.mxu0 0
        %2209 = vmatpush2.bf16.msra.mxu0 0
        %2210 = vmatprep.subr.bf16.mxu0 0
        %2211 = vmatpush2.bf16.msra.mxu0 0
        %2212 = vmatprep.mubr.bf16.mxu0 0
        %2213 = vmatmul.mubr.bf16.gmra.mxu0 %v2101
        %v2214 = vpop.f32.mrf.mxu0
        %v2215 = vadd.f32 %v2130, %v2214
        %v2216 = vpop.f32.mrf.mxu0
        %v2217 = vpop.f32.mrf.mxu0
        %v2218 = vadd.f32 %v2130, %v2217
        %v2219 = vpop.f32.mrf.mxu0
        %2220 = vmatprep.mubr.bf16.mxu0 0
        %2221 = vmatmul.mubr.bf16.gmra.mxu0 %v2102
        %v2222 = vpop.f32.mrf.mxu0
        %v2223 = vadd.f32 %v2130, %v2222
        %v2224 = vpop.f32.mrf.mxu0
        %v2225 = vpop.f32.mrf.mxu0
        %v2226 = vadd.f32 %v2130, %v2225
        %v2227 = vpop.f32.mrf.mxu0
        %2228 = vmatprep.mubr.bf16.mxu0 0
        %2229 = vmatmul.mubr.bf16.gmra.mxu0 %v2103
        %v2230 = vpop.f32.mrf.mxu0
        %v2231 = vadd.f32 %v2130, %v2230
        %v2232 = vpop.f32.mrf.mxu0
        %v2233 = vpop.f32.mrf.mxu0
        %v2234 = vadd.f32 %v2130, %v2233
        %v2235 = vpop.f32.mrf.mxu0
        %2236 = vmatprep.mubr.bf16.mxu0 0
        %2237 = vmatmul.mubr.bf16.gmra.mxu0 %v2104
        %v2238 = vpop.f32.mrf.mxu0
        %v2239 = vadd.f32 %v2130, %v2238
        %v2240 = vpop.f32.mrf.mxu0
        %v2241 = vpop.f32.mrf.mxu0
        %v2242 = vadd.f32 %v2130, %v2241
        %v2243 = vpop.f32.mrf.mxu0
        %2244 = vmatprep.mubr.bf16.mxu0 0
        %2245 = vmatmul.mubr.bf16.gmra.mxu0 %v2105
        %v2246 = vpop.f32.mrf.mxu0
        %v2247 = vadd.f32 %v2130, %v2246
        %v2248 = vpop.f32.mrf.mxu0
        %v2249 = vpop.f32.mrf.mxu0
        %v2250 = vadd.f32 %v2130, %v2249
        %v2251 = vpop.f32.mrf.mxu0
        %2252 = vmatprep.mubr.bf16.mxu0 0
        %2253 = vmatmul.mubr.bf16.gmra.mxu0 %v2106
        %v2254 = vpop.f32.mrf.mxu0
        %v2255 = vadd.f32 %v2130, %v2254
        %v2256 = vpop.f32.mrf.mxu0
        %v2257 = vpop.f32.mrf.mxu0
        %v2258 = vadd.f32 %v2130, %v2257
        %v2259 = vpop.f32.mrf.mxu0
        %2260 = vmatprep.mubr.bf16.mxu0 0
        %2261 = vmatmul.mubr.bf16.gmra.mxu0 %v2107
        %v2262 = vpop.f32.mrf.mxu0
        %v2263 = vadd.f32 %v2130, %v2262
        %v2264 = vpop.f32.mrf.mxu0
        %v2265 = vpop.f32.mrf.mxu0
        %v2266 = vadd.f32 %v2130, %v2265
        %v2267 = vpop.f32.mrf.mxu0
        %2268 = vmatprep.mubr.bf16.mxu0 0
        %2269 = vmatmul.mubr.bf16.gmra.mxu0 %v2108
        %v2270 = vpop.f32.mrf.mxu0
        %v2271 = vadd.f32 %v2130, %v2270
        %v2272 = vpop.f32.mrf.mxu0
        %v2273 = vpop.f32.mrf.mxu0
        %v2274 = vadd.f32 %v2130, %v2273
        %v2275 = vpop.f32.mrf.mxu0
        %2276 = vdwg.mxu0
        %v2277 = vunpack.c.l.bf16 %v526
        %v2278 = vunpack.c.l.bf16 %v527
        %v2279 = vunpack.c.l.bf16 %v528
        %v2280 = vunpack.c.l.bf16 %v530
        %v2281 = vunpack.c.l.bf16 %v531
        %v2282 = vunpack.c.l.bf16 %v532
        %v2283 = vunpack.c.l.bf16 %v534
        %v2284 = vunpack.c.l.bf16 %v535
        %v2285 = vunpack.c.l.bf16 %v536
        %v2286 = vunpack.c.l.bf16 %v538
        %v2287 = vunpack.c.l.bf16 %v539
        %v2288 = vunpack.c.l.bf16 %v540
        %v2289 = vunpack.c.l.bf16 %v542
        %v2290 = vunpack.c.l.bf16 %v543
        %v2291 = vunpack.c.l.bf16 %v544
        %v2292 = vunpack.c.l.bf16 %v546
        %v2293 = vunpack.c.l.bf16 %v547
        %v2294 = vunpack.c.l.bf16 %v548
        %v2295 = vunpack.c.l.bf16 %v550
        %v2296 = vunpack.c.l.bf16 %v551
        %v2297 = vunpack.c.l.bf16 %v552
        %v2298 = vunpack.c.l.bf16 %v554
        %v2299 = vunpack.c.l.bf16 %v555
        %v2300 = vunpack.c.l.bf16 %v556
        %v2325 = vrot.slane %v2277, 1
        %v2326 = vrot.slane %v2278, 1
        %v2327 = vsel %vm1375, %v2325, %v2326
        %v2328 = vrot.slane %v2279, 1
        %v2329 = vsel %vm1375, %v2326, %v2328
        %v2330 = vrot.slane %v2280, 1
        %v2331 = vrot.slane %v2281, 1
        %v2332 = vsel %vm1375, %v2330, %v2331
        %v2333 = vrot.slane %v2282, 1
        %v2334 = vsel %vm1375, %v2331, %v2333
        %v2335 = vrot.slane %v2283, 1
        %v2336 = vrot.slane %v2284, 1
        %v2337 = vsel %vm1375, %v2335, %v2336
        %v2338 = vrot.slane %v2285, 1
        %v2339 = vsel %vm1375, %v2336, %v2338
        %v2340 = vrot.slane %v2286, 1
        %v2341 = vrot.slane %v2287, 1
        %v2342 = vsel %vm1375, %v2340, %v2341
        %v2343 = vrot.slane %v2288, 1
        %v2344 = vsel %vm1375, %v2341, %v2343
        %v2345 = vrot.slane %v2289, 1
        %v2346 = vrot.slane %v2290, 1
        %v2347 = vsel %vm1375, %v2345, %v2346
        %v2348 = vrot.slane %v2291, 1
        %v2349 = vsel %vm1375, %v2346, %v2348
        %v2350 = vrot.slane %v2292, 1
        %v2351 = vrot.slane %v2293, 1
        %v2352 = vsel %vm1375, %v2350, %v2351
        %v2353 = vrot.slane %v2294, 1
        %v2354 = vsel %vm1375, %v2351, %v2353
        %v2355 = vrot.slane %v2295, 1
        %v2356 = vrot.slane %v2296, 1
        %v2357 = vsel %vm1375, %v2355, %v2356
        %v2358 = vrot.slane %v2297, 1
        %v2359 = vsel %vm1375, %v2356, %v2358
        %v2360 = vrot.slane %v2298, 1
        %v2361 = vrot.slane %v2299, 1
        %v2362 = vsel %vm1375, %v2360, %v2361
        %v2363 = vrot.slane %v2300, 1
        %v2364 = vsel %vm1375, %v2361, %v2363
        %v2381 = vadd.f32 %v2215, %v2327
        %v2382 = vadd.f32 %v2218, %v2329
        %v2383 = vadd.f32 %v2223, %v2332
        %v2384 = vadd.f32 %v2226, %v2334
        %v2385 = vadd.f32 %v2231, %v2337
        %v2386 = vadd.f32 %v2234, %v2339
        %v2387 = vadd.f32 %v2239, %v2342
        %v2388 = vadd.f32 %v2242, %v2344
        %v2389 = vadd.f32 %v2247, %v2347
        %v2390 = vadd.f32 %v2250, %v2349
        %v2391 = vadd.f32 %v2255, %v2352
        %v2392 = vadd.f32 %v2258, %v2354
        %v2393 = vadd.f32 %v2263, %v2357
        %v2394 = vadd.f32 %v2266, %v2359
        %v2395 = vadd.f32 %v2271, %v2362
        %v2396 = vadd.f32 %v2274, %v2364
        %2397 = vst [vmem:[%s301] sm:$0xff] %v2381
        %2398 = vst [vmem:[%s301 + $0x8] sm:$0xff] %v2382
        %2399 = vst [vmem:[%s301 + $0x10] sm:$0xff] %v2383
        %2400 = vst [vmem:[%s301 + $0x18] sm:$0xff] %v2384
        %2401 = vst [vmem:[%s301 + $0x20] sm:$0xff] %v2385
        %2402 = vst [vmem:[%s301 + $0x28] sm:$0xff] %v2386
        %2403 = vst [vmem:[%s301 + $0x30] sm:$0xff] %v2387
        %2404 = vst [vmem:[%s301 + $0x38] sm:$0xff] %v2388
        %2405 = vst [vmem:[%s301 + $0x40] sm:$0xff] %v2389
        %2406 = vst [vmem:[%s301 + $0x48] sm:$0xff] %v2390
        %2407 = vst [vmem:[%s301 + $0x50] sm:$0xff] %v2391
        %2408 = vst [vmem:[%s301 + $0x58] sm:$0xff] %v2392
        %2409 = vst [vmem:[%s301 + $0x60] sm:$0xff] %v2393
        %2410 = vst [vmem:[%s301 + $0x68] sm:$0xff] %v2394
        %2411 = vst [vmem:[%s301 + $0x70] sm:$0xff] %v2395
        %2412 = vst [vmem:[%s301 + $0x78] sm:$0xff] %v2396
        %s2413 = sand.u32 %s197, 1
        %s2414 = scalar_lea.sflag [#allocation6], %s2413
        %s2415 = sand.u32 %s197, 1
        %s2416 = smul.addr %s2415, 128
        %s2417 = scalar_lea.vmem [#allocation7], %s2416
        // Predicated region
        $region129: #{tpu_custom_call.1} parent=47 // pred_check
          %p2418 = pneg %p207
        $region130: #{tpu_custom_call.1} parent=47 // pred_check_branch
          %2420 = sbr.rel (%p2418) target = $region132
        $region131: #{tpu_custom_call.1} parent=47 // pred_region
          %s2421 = smul.u32 8, %s28
          %s2423 = ssub.s32 2048, 2048
          %2424 = vsyncadd %s2414, %s2423
          %s2425 = smul.addr %s2421, 2
          %s2426 = smul.addr %s27, 32
          %s2427 = sadd.s32 %s2425, %s2426
          %s2428 = smul.addr %s2427, 128
          %s2429 = scalar_lea.hbm %s8, %s2428
          %s2430 = sshll.u32 %s2417, 4
          %s2431 = int_to_ptr.vmem [resolvable:$true] %s2430
          %2436 = dma.vmem_to_hbm [thread:$0]  %s2431, 2048, %s2429, %s2414, 128, 128, 8
        $region132: #{tpu_custom_call.1} parent=47 // pred_fallthru
          _
      $region48: #{tpu_custom_call.1} parent=5 // pred_fallthru
        _
      %p2437 = scmp.le.s32.totalorder 2, %s18
      // Predicated region
      $region133: #{tpu_custom_call.1} parent=5 // pred_check
        %p2438 = pneg %p2437
      $region134: #{tpu_custom_call.1} parent=5 // pred_check_branch
        %2440 = sbr.rel (%p2438) target = $region136
      $region135: #{tpu_custom_call.1} parent=5 // pred_region
        %s2441 = ssub.s32 %s18, 2
        // Predicated region
        $region137: #{tpu_custom_call.1} parent=135 // pred_check
          %p2442 = pneg %p213
        $region138: #{tpu_custom_call.1} parent=135 // pred_check_branch
          %2444 = sbr.rel (%p2442) target = $region140
        $region139: #{tpu_custom_call.1} parent=135 // pred_region
          %s2445 = sand.u32 %s198, 1
          %s2446 = scalar_lea.sflag [#allocation6], %s2445
          %s2447 = sand.u32 %s198, 1
          %s2448 = smul.addr %s2447, 128
          %s2449 = scalar_lea.vmem [#allocation7], %s2448
          %2450 = dma.done %s2446, 2048
        $region140: #{tpu_custom_call.1} parent=135 // pred_fallthru
          _
      $region136: #{tpu_custom_call.1} parent=5 // pred_fallthru
        _
    $region6: #{tpu_custom_call.1} parent=1 // loop_footer
      %s22 = sadd.s32 1, %s18
    $region7: #{tpu_custom_call.1} parent=1 // loop_footer_branch
      %17 = sbr.rel target = $region3
    $region8: #{tpu_custom_call.1} parent=1 // loop_exit
      _
    %2451 = vsyncpa [#allocation5], 1
    %s2452 = scalar_lea.sflag [#allocation5], 1
    %2453 = vsyncpa %s2452, 1
    %2454 = vsyncpa [#allocation6], 1
    %s2455 = scalar_lea.sflag [#allocation6], 1
    %2456 = vsyncpa %s2455, 1
  %2457 = vsyncmov [#allocation3]
  %s2458 = vpop.sfrf %2457
  %p2459 = scmp.eq.s32.totalorder %s2458, 0
  %p2460 = pneg %p2459
  %2462 = shalt.err (%p2460)
  %s2463 = scalar_lea.sflag [#allocation3], 1
  %2464 = vsyncmov %s2463
  %s2465 = vpop.sfrf %2464
  %p2466 = scmp.eq.s32.totalorder %s2465, 0
  %p2467 = pneg %p2466
  %2469 = shalt.err (%p2467)

</llo_original>
